<compile_context>
chip_gen: v7x
topology: tpu7x:2x2x1
jax: 0.10.0
libtpu: 0.0.40
codegen_flags: <defaults>
</compile_context>

<pallas_src>
import functools

import jax
import jax.numpy as jnp
from jax.experimental import pallas as pl
from jax.experimental.pallas import tpu as pltpu

REALTYPE = jnp.float32
COMPLEXTYPE = jnp.complex64
_HIGHEST = jax.lax.Precision.HIGHEST


def _round_up(n, m):
    return ((n + m - 1) // m) * m


# --------------------------------------------------------------------------
# Fused Pallas kernel.
#   grid = (B, H/TH, K); K innermost ('arbitrary') is the reduction axis.
#   per step: corner product (Rp x Cp), Fh_tile @ P @ Fw (8 real MXU
#   matmuls), accumulate scale[k]*(re^2+im^2) into the resident DoseNom
#   output block, sigmoid-finalize every dose on the last k.
# --------------------------------------------------------------------------
def _fused_litho_kernel(scale_ref, mr_ref, mi_ref, kr_ref, ki_ref,
                        fhr_ref, fhi_ref, fwr_ref, fwi_ref, *out_refs,
                        steepness, target, dose_sqs):
    k = pl.program_id(2)

    # Corner frequency product (complex, tiny Rp x Cp).
    mr = mr_ref[0]
    mi = mi_ref[0]
    kr = kr_ref[0]
    ki = ki_ref[0]
    pr = mr * kr - mi * ki
    pi = mr * ki + mi * kr

    # img_tile = Fh_tile @ P @ Fw   (complex, realised as real MXU matmuls)
    dot = functools.partial(jnp.dot, preferred_element_type=jnp.float32)
    fhr = fhr_ref[...]
    fhi = fhi_ref[...]
    tr = dot(fhr, pr) - dot(fhi, pi)          # (TH, Cp)
    ti = dot(fhr, pi) + dot(fhi, pr)
    fwr = fwr_ref[...]
    fwi = fwi_ref[...]
    re = dot(tr, fwr) - dot(ti, fwi)          # (TH, W)
    im = dot(tr, fwi) + dot(ti, fwr)

    contrib = scale_ref[k] * (re * re + im * im)

    acc_ref = out_refs[0]   # resident across k (index map ignores k) -> accumulator

    @pl.when(k == 0)
    def _():
        acc_ref[0] = contrib

    @pl.when(k > 0)
    def _():
        acc_ref[0] = acc_ref[0] + contrib

    @pl.when(k == pl.num_programs(2) - 1)
    def _():
        acc = acc_ref[0]
        for o_ref, dsq in zip(out_refs, dose_sqs):
            o_ref[0] = jax.nn.sigmoid(steepness * (dsq * acc - target))


# --------------------------------------------------------------------------
# Generation-aware tiling helpers.
# --------------------------------------------------------------------------
def _vmem_budget_and_limit():
    """(block budget, base vmem limit, physical cap) per TPU generation."""
    cap = None
    try:
        cap = int(pltpu.get_tpu_info().vmem_capacity_bytes)
        if cap <= 0:
            cap = None
    except Exception:
        cap = None
    if cap is None:
        return 20 << 20, 40 << 20, 128 << 20
    if cap >= (100 << 20):                  # v5e / v6e: 128 MiB VMEM
        return 48 << 20, 80 << 20, cap
    return 22 << 20, 44 << 20, cap          # v7x: 64 MiB VMEM


def _block_vmem_bytes(TH, W, Rp, Cp, n_out):
    fh = 2 * 2 * TH * Rp * 4                # 2 planes x 2 buffers
    fw = 2 * 2 * Cp * W * 4
    corners = 4 * 2 * Rp * Cp * 4           # mask + kernel corners, re/im
    outs = n_out * 2 * TH * W * 4
    return fh + fw + corners + outs


def _choose_row_tile(H, W, Rp, Cp, n_out, budget):
    fixed = 2 * 2 * Cp * W * 4 + 4 * 2 * Rp * Cp * 4
    per_row = (2 * 2 * Rp + n_out * 2 * W) * 4
    max_rows = max(8, (budget - fixed) // per_row)
    if H <= max_rows:
        return H
    th = (min(max_rows, H) // 8) * 8
    while th >= 8:
        if H % th == 0:
            return th
        th -= 8
    return H   # fallback: full-dim block is always legal; caller bumps vmem limit


def fused_litho(scales, m_r, m_i, k_r, k_i, fh_r, fh_i, fw_r, fw_i,
                dose_sqs, steepness, target):
    B, Rp, Cp = m_r.shape
    K = k_r.shape[0]
    H = fh_r.shape[0]
    W = fw_r.shape[1]
    n_out = len(dose_sqs)

    budget, base_limit, phys = _vmem_budget_and_limit()
    TH = _choose_row_tile(H, W, Rp, Cp, n_out, budget)
    # v7x has two TensorCores: keep >= 2 steps on the 'parallel' axes.
    if B * (H // TH) < 2 and H >= 16 and (H // 2) % 8 == 0:
        TH = H // 2
    nH = H // TH
    est = _block_vmem_bytes(TH, W, Rp, Cp, n_out)
    vmem_limit = int(min(phys, max(base_limit, est + (8 << 20))))

    kernel = functools.partial(
        _fused_litho_kernel, steepness=float(steepness), target=float(target),
        dose_sqs=tuple(float(d) for d in dose_sqs))

    corner_m = pl.BlockSpec((1, Rp, Cp), lambda b, h, k: (b, 0, 0))
    corner_k = pl.BlockSpec((1, Rp, Cp), lambda b, h, k: (k, 0, 0))
    fh_spec = pl.BlockSpec((TH, Rp), lambda b, h, k: (h, 0))
    fw_spec = pl.BlockSpec((Cp, W), lambda b, h, k: (0, 0))
    out_spec = pl.BlockSpec((1, TH, W), lambda b, h, k: (b, h, 0))

    return pl.pallas_call(
        kernel,
        out_shape=tuple(jax.ShapeDtypeStruct((B, H, W), REALTYPE)
                        for _ in range(n_out)),
        grid=(B, nH, K),
        in_specs=[pl.BlockSpec(memory_space=pltpu.MemorySpace.SMEM),   # scales
                  corner_m, corner_m, corner_k, corner_k,
                  fh_spec, fh_spec, fw_spec, fw_spec],
        out_specs=tuple(out_spec for _ in range(n_out)),
        compiler_params=pltpu.CompilerParams(
            dimension_semantics=("parallel", "parallel", "arbitrary"),
            vmem_limit_bytes=vmem_limit),
    )(scales[:K].astype(REALTYPE), m_r, m_i, k_r, k_i, fh_r, fh_i, fw_r, fw_i)


# --------------------------------------------------------------------------
# Glue (plain JAX): corner forward-DFT of the mask, compact kernel corner,
# inverse-DFT factor matrices.  All tiny relative to the fused kernel.
# --------------------------------------------------------------------------
def _dft_pieces(scaled, kernels, kernelNum):
    B, H, W = scaled.shape
    knx, kny = kernels.shape[-2:]
    knxh, knyh = knx // 2, kny // 2
    R, C = 2 * knxh + 1, 2 * knyh + 1
    assert R <= H and C <= W, "kernel support larger than simulation resolution"
    Rp, Cp = _round_up(R, 128), _round_up(C, 128)   # MXU-friendly contraction dims

    u = jnp.concatenate([jnp.arange(knxh + 1), jnp.arange(H - knxh, H)])
    v = jnp.concatenate([jnp.arange(knyh + 1), jnp.arange(W - knyh, W)])
    xs = jnp.arange(H)
    ys = jnp.arange(W)
    # exact integer phases (mod N) -> accurate angles even at 2048^2
    ang_h = (2.0 * jnp.pi / H) * ((u[:, None] * xs[None, :]) % H).astype(REALTYPE)  # (R,H)
    ang_w = (2.0 * jnp.pi / W) * ((ys[:, None] * v[None, :]) % W).astype(REALTYPE)  # (W,C)

    # forward (analysis) factors e^{-i ang}; norm='forward' => 1/(H*W)
    gh_r, gh_i = jnp.cos(ang_h), -jnp.sin(ang_h)
    gw_r, gw_i = jnp.cos(ang_w), -jnp.sin(ang_w)
    t_r = jnp.einsum('rh,bhw->brw', gh_r, scaled, precision=_HIGHEST)
    t_i = jnp.einsum('rh,bhw->brw', gh_i, scaled, precision=_HIGHEST)
    inv_n = 1.0 / (H * W)
    m_r = (jnp.einsum('brw,wc->brc', t_r, gw_r, precision=_HIGHEST)
           - jnp.einsum('brw,wc->brc', t_i, gw_i, precision=_HIGHEST)) * inv_n
    m_i = (jnp.einsum('brw,wc->brc', t_r, gw_i, precision=_HIGHEST)
           + jnp.einsum('brw,wc->brc', t_i, gw_r, precision=_HIGHEST)) * inv_n

    # compact frequency kernel corner (quadrant placement of _kernelMult)
    kk = kernels[:kernelNum]
    eff = jnp.zeros((kernelNum, R, C), COMPLEXTYPE)
    eff = eff.at[:, :knxh + 1, :knyh + 1].set(kk[:, knx - (knxh + 1):, kny - (knyh + 1):])
    eff = eff.at[:, :knxh + 1, knyh + 1:].set(kk[:, knx - (knxh + 1):, :knyh])
    eff = eff.at[:, knxh + 1:, :knyh + 1].set(kk[:, :knxh, kny - (knyh + 1):])
    eff = eff.at[:, knxh + 1:, knyh + 1:].set(kk[:, :knxh, :knyh])
    k_r = jnp.real(eff).astype(REALTYPE)
    k_i = jnp.imag(eff).astype(REALTYPE)

    # inverse (synthesis) factors e^{+i ang}; norm='forward' inverse is unnormalised
    fh_r, fh_i = jnp.cos(ang_h).T, jnp.sin(ang_h).T     # (H, R)
    fw_r, fw_i = jnp.cos(ang_w).T, jnp.sin(ang_w).T     # (C, W)

    pad_rc = lambda a: jnp.pad(a, ((0, 0), (0, Rp - R), (0, Cp - C)))
    m_r, m_i = pad_rc(m_r), pad_rc(m_i)
    k_r, k_i = pad_rc(k_r), pad_rc(k_i)
    fh_r = jnp.pad(fh_r, ((0, 0), (0, Rp - R)))
    fh_i = jnp.pad(fh_i, ((0, 0), (0, Rp - R)))
    fw_r = jnp.pad(fw_r, ((0, Cp - C), (0, 0)))
    fw_i = jnp.pad(fw_i, ((0, Cp - C), (0, 0)))
    return (m_r.astype(REALTYPE), m_i.astype(REALTYPE), k_r, k_i,
            fh_r.astype(REALTYPE), fh_i.astype(REALTYPE),
            fw_r.astype(REALTYPE), fw_i.astype(REALTYPE))


def _resize_nearest(x, size):
    """Matches torch F.interpolate(mode='nearest'): idx = floor(i * in/out)."""
    B, H, W = x.shape
    if H == size and W == size:
        return x
    ix = jnp.floor(jnp.arange(size) * (H / size)).astype(jnp.int32)
    iy = jnp.floor(jnp.arange(size) * (W / size)).astype(jnp.int32)
    return x[:, ix][:, :, iy]


def litho_forward(mask, cfg, kernels_focus, scales_focus,
                  kernels_defocus, scales_defocus):
    """Reproduces LithoSim.forward.  mask: (h, w) or (B, h, w) float32."""
    squeeze = (mask.ndim == 2)
    m = mask[None] if squeeze else mask
    B, h, w = m.shape
    canvas, res = cfg['Canvas'], cfg['Resolution']

    # pad (centered, like LithoSim.pad)
    if h == canvas and w == canvas:
        ox = oy = 0
        padded = m.astype(REALTYPE)
    else:
        ox = round((canvas - h) / 2)
        oy = round((canvas - w) / 2)
        padded = jnp.zeros((B, canvas, canvas), REALTYPE).at[
            :, ox:ox + h, oy:oy + w].set(m)

    # scaleForward (nearest)
    scaled = _resize_nearest(padded, res)

    knum = cfg['KernelNum']
    steep, target = cfg['PrintSteepness'], cfg['TargetDensity']

    # Focus path runs ONCE; DoseNom / DoseMax folded in as dose^2 scales.
    pieces_f = _dft_pieces(scaled, kernels_focus, knum)
    printedNom, printedMax = fused_litho(
        scales_focus, *pieces_f,
        dose_sqs=(cfg['DoseNom'] ** 2, cfg['DoseMax'] ** 2),
        steepness=steep, target=target)

    pieces_d = _dft_pieces(scaled, kernels_defocus, knum)
    printedMin = fused_litho(
        scales_defocus, *pieces_d, dose_sqs=(cfg['DoseMin'] ** 2,),
        steepness=steep, target=target)[0]

    # scaleBackward (nearest)
    printedNom = _resize_nearest(printedNom, canvas)
    printedMax = _resize_nearest(printedMax, canvas)
    printedMin = _resize_nearest(printedMin, canvas)

    # unpad (faithful to the PyTorch reference: unpad() returns the *mask*
    # itself when the input already fills the canvas — intentional).
    def unpad(img):
        if h == canvas and w == canvas:
            return m
        return img[:, ox:ox + h, oy:oy + w]

    outs = (unpad(printedNom), unpad(printedMax), unpad(printedMin))
    if squeeze:
        outs = tuple(o[0] for o in outs)
    return outs


# --------------------------------------------------------------------------
# Plain-JAX reference (mirrors the PyTorch math) for a correctness check.
# --------------------------------------------------------------------------
def _reference_printed(mask3, dose, kernels, scales, K, steep, target):
    B, H, W = mask3.shape
    knx, kny = kernels.shape[-2:]
    knxh, knyh = knx // 2, kny // 2
    mf = jnp.fft.fft2((dose * mask3).astype(COMPLEXTYPE), norm='forward')[:, None]
    k = kernels[:K][None]
    out = jnp.zeros((B, K, H, W), COMPLEXTYPE)
    out = out.at[:, :, :knxh + 1, :knyh + 1].set(
        mf[:, :, :knxh + 1, :knyh + 1] * k[:, :, knx - (knxh + 1):, kny - (knyh + 1):])
    out = out.at[:, :, :knxh + 1, W - knyh:].set(
        mf[:, :, :knxh + 1, W - knyh:] * k[:, :, knx - (knxh + 1):, :knyh])
    out = out.at[:, :, H - knxh:, :knyh + 1].set(
        mf[:, :, H - knxh:, :knyh + 1] * k[:, :, :knxh, kny - (knyh + 1):])
    out = out.at[:, :, H - knxh:, W - knyh:].set(
        mf[:, :, H - knxh:, W - knyh:] * k[:, :, :knxh, :knyh])
    img = jnp.fft.ifft2(out, norm='forward')
    aerial = jnp.sum(scales[:K][None, :, None, None] * jnp.abs(img) ** 2, axis=1)
    return jax.nn.sigmoid(steep * (aerial - target))


if __name__ == "__main__":
    # Synthetic ICCAD'13-style config (small shapes); canvas == resolution so
    # the scaleForward/Backward branch is the identity path, pad/unpad active.
    cfg = dict(KernelDir='.', KernelNum=8, TargetDensity=0.225,
               PrintThresh=0.225, PrintSteepness=50.0,
               DoseMax=1.02, DoseMin=0.98, DoseNom=1.0,
               Canvas=32, Resolution=32)

    NK, KNX, KNY = 8, 7, 7
    key = jax.random.PRNGKey(0)
    k1, k2, k3, k4, k5, k6, km = jax.random.split(key, 7)

    focus_kernels = 0.1 * jax.lax.complex(
        jax.random.normal(k1, (NK, KNX, KNY), REALTYPE),
        jax.random.normal(k2, (NK, KNX, KNY), REALTYPE))
    focus_scales = 0.1 * jnp.abs(jax.random.normal(k3, (NK,), REALTYPE)) + 0.01
    defocus_kernels = 0.1 * jax.lax.complex(
        jax.random.normal(k4, (NK, KNX, KNY), REALTYPE),
        jax.random.normal(k5, (NK, KNX, KNY), REALTYPE))
    defocus_scales = 0.1 * jnp.abs(jax.random.normal(k6, (NK,), REALTYPE)) + 0.01

    # mask: batch of binary layouts, smaller than the canvas.
    mask = (jax.random.uniform(km, (2, 16, 16)) > 0.5).astype(REALTYPE)

    printedNom, printedMax, printedMin = litho_forward(
        mask, cfg, focus_kernels, focus_scales, defocus_kernels, defocus_scales)
    jax.block_until_ready((printedNom, printedMax, printedMin))

    assert printedNom.shape == mask.shape
    assert printedMax.shape == mask.shape
    assert printedMin.shape == mask.shape

    # Correctness check against the PyTorch-equivalent plain-JAX (FFT) math.
    padded = jnp.zeros((2, 32, 32), REALTYPE).at[:, 8:24, 8:24].set(mask)
    refs = (
        _reference_printed(padded, cfg['DoseNom'], focus_kernels, focus_scales,
                           cfg['KernelNum'], cfg['PrintSteepness'],
                           cfg['TargetDensity'])[:, 8:24, 8:24],
        _reference_printed(padded, cfg['DoseMax'], focus_kernels, focus_scales,
                           cfg['KernelNum'], cfg['PrintSteepness'],
                           cfg['TargetDensity'])[:, 8:24, 8:24],
        _reference_printed(padded, cfg['DoseMin'], defocus_kernels, defocus_scales,
                           cfg['KernelNum'], cfg['PrintSteepness'],
                           cfg['TargetDensity'])[:, 8:24, 8:24],
    )
    for got, ref in zip((printedNom, printedMax, printedMin), refs):
        err = float(jnp.max(jnp.abs(got - ref)))
        assert err < 2e-3, f"mismatch vs reference: {err}"

    print("KERNEL_OK")
</pallas_src>

<mosaic_0001>
module attributes {stable_mosaic.version = 11 : i64} {
  func.func @_fused_litho_kernel(%arg0: i32, %arg1: i32, %arg2: i32, %arg3: memref<8xf32, #tpu.memory_space<smem>>, %arg4: memref<1x128x128xf32, #tpu.memory_space<vmem>>, %arg5: memref<1x128x128xf32, #tpu.memory_space<vmem>>, %arg6: memref<1x128x128xf32, #tpu.memory_space<vmem>>, %arg7: memref<1x128x128xf32, #tpu.memory_space<vmem>>, %arg8: memref<32x128xf32, #tpu.memory_space<vmem>>, %arg9: memref<32x128xf32, #tpu.memory_space<vmem>>, %arg10: memref<128x32xf32, #tpu.memory_space<vmem>>, %arg11: memref<128x32xf32, #tpu.memory_space<vmem>>, %arg12: memref<1x32x32xf32, #tpu.memory_space<vmem>>, %arg13: memref<1x32x32xf32, #tpu.memory_space<vmem>>) attributes {dimension_semantics = [#tpu.dimension_semantics<parallel>, #tpu.dimension_semantics<parallel>, #tpu.dimension_semantics<arbitrary>], iteration_bounds = array<i64: 2, 1, 8>, scalar_prefetch = 0 : i64, scratch_operands = 0 : i64, tpu.core_type = #tpu.core_type<tc>, window_params = [{transform_indices = @transform_0, window_bounds = array<i64: 8>}, {transform_indices = @transform_1, window_bounds = array<i64: 1, 128, 128>}, {transform_indices = @transform_2, window_bounds = array<i64: 1, 128, 128>}, {transform_indices = @transform_3, window_bounds = array<i64: 1, 128, 128>}, {transform_indices = @transform_4, window_bounds = array<i64: 1, 128, 128>}, {transform_indices = @transform_5, window_bounds = array<i64: 32, 128>}, {transform_indices = @transform_6, window_bounds = array<i64: 32, 128>}, {pipeline_mode = #tpu.pipeline_mode<synchronous>, transform_indices = @transform_7, window_bounds = array<i64: 128, 32>}, {pipeline_mode = #tpu.pipeline_mode<synchronous>, transform_indices = @transform_8, window_bounds = array<i64: 128, 32>}, {transform_indices = @transform_9, window_bounds = array<i64: 1, 32, 32>}, {transform_indices = @transform_10, window_bounds = array<i64: 1, 32, 32>}]} {
    %c0 = arith.constant 0 : index
    %c0_0 = arith.constant 0 : index
    %c0_1 = arith.constant 0 : index
    %0 = vector.load %arg4[%c0, %c0_0, %c0_1] : memref<1x128x128xf32, #tpu.memory_space<vmem>>, vector<1x128x128xf32>
    %1 = vector.shape_cast %0 : vector<1x128x128xf32> to vector<128x128xf32>
    %c0_2 = arith.constant 0 : index
    %c0_3 = arith.constant 0 : index
    %c0_4 = arith.constant 0 : index
    %2 = vector.load %arg5[%c0_2, %c0_3, %c0_4] : memref<1x128x128xf32, #tpu.memory_space<vmem>>, vector<1x128x128xf32>
    %3 = vector.shape_cast %2 : vector<1x128x128xf32> to vector<128x128xf32>
    %c0_5 = arith.constant 0 : index
    %c0_6 = arith.constant 0 : index
    %c0_7 = arith.constant 0 : index
    %4 = vector.load %arg6[%c0_5, %c0_6, %c0_7] : memref<1x128x128xf32, #tpu.memory_space<vmem>>, vector<1x128x128xf32>
    %5 = vector.shape_cast %4 : vector<1x128x128xf32> to vector<128x128xf32>
    %c0_8 = arith.constant 0 : index
    %c0_9 = arith.constant 0 : index
    %c0_10 = arith.constant 0 : index
    %6 = vector.load %arg7[%c0_8, %c0_9, %c0_10] : memref<1x128x128xf32, #tpu.memory_space<vmem>>, vector<1x128x128xf32>
    %7 = vector.shape_cast %6 : vector<1x128x128xf32> to vector<128x128xf32>
    %8 = arith.mulf %1, %5 : vector<128x128xf32>
    %9 = arith.mulf %3, %7 : vector<128x128xf32>
    %10 = arith.subf %8, %9 : vector<128x128xf32>
    %11 = arith.mulf %1, %7 : vector<128x128xf32>
    %12 = arith.mulf %3, %5 : vector<128x128xf32>
    %13 = arith.addf %11, %12 : vector<128x128xf32>
    %c0_11 = arith.constant 0 : index
    %c0_12 = arith.constant 0 : index
    %14 = vector.load %arg8[%c0_11, %c0_12] : memref<32x128xf32, #tpu.memory_space<vmem>>, vector<32x128xf32>
    %c0_13 = arith.constant 0 : index
    %c0_14 = arith.constant 0 : index
    %15 = vector.load %arg9[%c0_13, %c0_14] : memref<32x128xf32, #tpu.memory_space<vmem>>, vector<32x128xf32>
    %cst = arith.constant dense<0.000000e+00> : vector<32x128xf32>
    %16 = tpu.matmul %14, %10, %cst {dimension_numbers = #tpu.dot_dimension_numbers<[1], [0], [0], [1], [0, 0, 1, 1], [], []>} : vector<32x128xf32>, vector<128x128xf32>, vector<32x128xf32> -> vector<32x128xf32>
    %cst_15 = arith.constant dense<0.000000e+00> : vector<32x128xf32>
    %17 = tpu.matmul %15, %13, %cst_15 {dimension_numbers = #tpu.dot_dimension_numbers<[1], [0], [0], [1], [0, 0, 1, 1], [], []>} : vector<32x128xf32>, vector<128x128xf32>, vector<32x128xf32> -> vector<32x128xf32>
    %18 = arith.subf %16, %17 : vector<32x128xf32>
    %cst_16 = arith.constant dense<0.000000e+00> : vector<32x128xf32>
    %19 = tpu.matmul %14, %13, %cst_16 {dimension_numbers = #tpu.dot_dimension_numbers<[1], [0], [0], [1], [0, 0, 1, 1], [], []>} : vector<32x128xf32>, vector<128x128xf32>, vector<32x128xf32> -> vector<32x128xf32>
    %cst_17 = arith.constant dense<0.000000e+00> : vector<32x128xf32>
    %20 = tpu.matmul %15, %10, %cst_17 {dimension_numbers = #tpu.dot_dimension_numbers<[1], [0], [0], [1], [0, 0, 1, 1], [], []>} : vector<32x128xf32>, vector<128x128xf32>, vector<32x128xf32> -> vector<32x128xf32>
    %21 = arith.addf %19, %20 : vector<32x128xf32>
    %c0_18 = arith.constant 0 : index
    %c0_19 = arith.constant 0 : index
    %22 = vector.load %arg10[%c0_18, %c0_19] : memref<128x32xf32, #tpu.memory_space<vmem>>, vector<128x32xf32>
    %c0_20 = arith.constant 0 : index
    %c0_21 = arith.constant 0 : index
    %23 = vector.load %arg11[%c0_20, %c0_21] : memref<128x32xf32, #tpu.memory_space<vmem>>, vector<128x32xf32>
    %cst_22 = arith.constant dense<0.000000e+00> : vector<32x32xf32>
    %24 = tpu.matmul %18, %22, %cst_22 {dimension_numbers = #tpu.dot_dimension_numbers<[1], [0], [0], [1], [0, 0, 1, 1], [], []>} : vector<32x128xf32>, vector<128x32xf32>, vector<32x32xf32> -> vector<32x32xf32>
    %cst_23 = arith.constant dense<0.000000e+00> : vector<32x32xf32>
    %25 = tpu.matmul %21, %23, %cst_23 {dimension_numbers = #tpu.dot_dimension_numbers<[1], [0], [0], [1], [0, 0, 1, 1], [], []>} : vector<32x128xf32>, vector<128x32xf32>, vector<32x32xf32> -> vector<32x32xf32>
    %26 = arith.subf %24, %25 : vector<32x32xf32>
    %cst_24 = arith.constant dense<0.000000e+00> : vector<32x32xf32>
    %27 = tpu.matmul %18, %23, %cst_24 {dimension_numbers = #tpu.dot_dimension_numbers<[1], [0], [0], [1], [0, 0, 1, 1], [], []>} : vector<32x128xf32>, vector<128x32xf32>, vector<32x32xf32> -> vector<32x32xf32>
    %cst_25 = arith.constant dense<0.000000e+00> : vector<32x32xf32>
    %28 = tpu.matmul %21, %22, %cst_25 {dimension_numbers = #tpu.dot_dimension_numbers<[1], [0], [0], [1], [0, 0, 1, 1], [], []>} : vector<32x128xf32>, vector<128x32xf32>, vector<32x32xf32> -> vector<32x32xf32>
    %29 = arith.addf %27, %28 : vector<32x32xf32>
    %30 = arith.index_cast %arg2 : i32 to index
    %31 = memref.load %arg3[%30] : memref<8xf32, #tpu.memory_space<smem>>
    %32 = arith.mulf %26, %26 : vector<32x32xf32>
    %33 = arith.mulf %29, %29 : vector<32x32xf32>
    %34 = arith.addf %32, %33 : vector<32x32xf32>
    %35 = vector.broadcast %31 : f32 to vector<32x32xf32>
    %36 = arith.mulf %35, %34 : vector<32x32xf32>
    %c0_i32 = arith.constant 0 : i32
    %37 = arith.cmpi eq, %arg2, %c0_i32 : i32
    %38 = arith.extui %37 : i1 to i32
    %c0_i32_26 = arith.constant 0 : i32
    %39 = arith.cmpi ne, %38, %c0_i32_26 : i32
    scf.if %39 {
      %c0_30 = arith.constant 0 : index
      %c0_31 = arith.constant 0 : index
      %c0_32 = arith.constant 0 : index
      %46 = vector.load %arg12[%c0_30, %c0_31, %c0_32] : memref<1x32x32xf32, #tpu.memory_space<vmem>>, vector<1x32x32xf32>
      %47 = vector.shape_cast %46 : vector<1x32x32xf32> to vector<32x32xf32>
      %48 = vector.shape_cast %36 : vector<32x32xf32> to vector<1x32x32xf32>
      tpu.vector_store %arg12[%c0_30, %c0_31, %c0_32], %48 {strides = array<i32>} : memref<1x32x32xf32, #tpu.memory_space<vmem>>, vector<1x32x32xf32>,
    } else {
    }
    %c0_i32_27 = arith.constant 0 : i32
    %40 = arith.cmpi sgt, %arg2, %c0_i32_27 : i32
    %41 = arith.extui %40 : i1 to i32
    %c0_i32_28 = arith.constant 0 : i32
    %42 = arith.cmpi ne, %41, %c0_i32_28 : i32
    scf.if %42 {
      %c0_30 = arith.constant 0 : index
      %c0_31 = arith.constant 0 : index
      %c0_32 = arith.constant 0 : index
      %46 = vector.load %arg12[%c0_30, %c0_31, %c0_32] : memref<1x32x32xf32, #tpu.memory_space<vmem>>, vector<1x32x32xf32>
      %47 = vector.shape_cast %46 : vector<1x32x32xf32> to vector<32x32xf32>
      %48 = arith.addf %47, %36 : vector<32x32xf32>
      %c0_33 = arith.constant 0 : index
      %c0_34 = arith.constant 0 : index
      %c0_35 = arith.constant 0 : index
      %49 = vector.load %arg12[%c0_33, %c0_34, %c0_35] : memref<1x32x32xf32, #tpu.memory_space<vmem>>, vector<1x32x32xf32>
      %50 = vector.shape_cast %49 : vector<1x32x32xf32> to vector<32x32xf32>
      %51 = vector.shape_cast %48 : vector<32x32xf32> to vector<1x32x32xf32>
      tpu.vector_store %arg12[%c0_33, %c0_34, %c0_35], %51 {strides = array<i32>} : memref<1x32x32xf32, #tpu.memory_space<vmem>>, vector<1x32x32xf32>,
    } else {
    }
    %c7_i32 = arith.constant 7 : i32
    %43 = arith.cmpi eq, %arg2, %c7_i32 : i32
    %44 = arith.extui %43 : i1 to i32
    %c0_i32_29 = arith.constant 0 : i32
    %45 = arith.cmpi ne, %44, %c0_i32_29 : i32
    scf.if %45 {
      %c0_30 = arith.constant 0 : index
      %c0_31 = arith.constant 0 : index
      %c0_32 = arith.constant 0 : index
      %46 = vector.load %arg12[%c0_30, %c0_31, %c0_32] : memref<1x32x32xf32, #tpu.memory_space<vmem>>, vector<1x32x32xf32>
      %47 = vector.shape_cast %46 : vector<1x32x32xf32> to vector<32x32xf32>
      %cst_33 = arith.constant 1.000000e+00 : f32
      %48 = vector.broadcast %cst_33 : f32 to vector<32x32xf32>
      %49 = arith.mulf %48, %47 : vector<32x32xf32>
      %cst_34 = arith.constant 2.250000e-01 : f32
      %50 = vector.broadcast %cst_34 : f32 to vector<32x32xf32>
      %51 = arith.subf %49, %50 : vector<32x32xf32>
      %cst_35 = arith.constant 5.000000e+01 : f32
      %52 = vector.broadcast %cst_35 : f32 to vector<32x32xf32>
      %53 = arith.mulf %52, %51 : vector<32x32xf32>
      %54 = arith.negf %53 : vector<32x32xf32>
      %55 = math.exp %54 : vector<32x32xf32>
      %cst_36 = arith.constant 1.000000e+00 : f32
      %56 = vector.broadcast %cst_36 : f32 to vector<32x32xf32>
      %57 = arith.addf %56, %55 : vector<32x32xf32>
      %58 = arith.divf %56, %57 : vector<32x32xf32>
      %c0_37 = arith.constant 0 : index
      %c0_38 = arith.constant 0 : index
      %c0_39 = arith.constant 0 : index
      %59 = vector.load %arg12[%c0_37, %c0_38, %c0_39] : memref<1x32x32xf32, #tpu.memory_space<vmem>>, vector<1x32x32xf32>
      %60 = vector.shape_cast %59 : vector<1x32x32xf32> to vector<32x32xf32>
      %61 = vector.shape_cast %58 : vector<32x32xf32> to vector<1x32x32xf32>
      tpu.vector_store %arg12[%c0_37, %c0_38, %c0_39], %61 {strides = array<i32>} : memref<1x32x32xf32, #tpu.memory_space<vmem>>, vector<1x32x32xf32>,
      %cst_40 = arith.constant 1.040400e+00 : f32
      %62 = vector.broadcast %cst_40 : f32 to vector<32x32xf32>
      %63 = arith.mulf %62, %47 : vector<32x32xf32>
      %cst_41 = arith.constant 2.250000e-01 : f32
      %64 = vector.broadcast %cst_41 : f32 to vector<32x32xf32>
      %65 = arith.subf %63, %64 : vector<32x32xf32>
      %cst_42 = arith.constant 5.000000e+01 : f32
      %66 = vector.broadcast %cst_42 : f32 to vector<32x32xf32>
      %67 = arith.mulf %66, %65 : vector<32x32xf32>
      %68 = arith.negf %67 : vector<32x32xf32>
      %69 = math.exp %68 : vector<32x32xf32>
      %cst_43 = arith.constant 1.000000e+00 : f32
      %70 = vector.broadcast %cst_43 : f32 to vector<32x32xf32>
      %71 = arith.addf %70, %69 : vector<32x32xf32>
      %72 = arith.divf %70, %71 : vector<32x32xf32>
      %c0_44 = arith.constant 0 : index
      %c0_45 = arith.constant 0 : index
      %c0_46 = arith.constant 0 : index
      %73 = vector.load %arg13[%c0_44, %c0_45, %c0_46] : memref<1x32x32xf32, #tpu.memory_space<vmem>>, vector<1x32x32xf32>
      %74 = vector.shape_cast %73 : vector<1x32x32xf32> to vector<32x32xf32>
      %75 = vector.shape_cast %72 : vector<32x32xf32> to vector<1x32x32xf32>
      tpu.vector_store %arg13[%c0_44, %c0_45, %c0_46], %75 {strides = array<i32>} : memref<1x32x32xf32, #tpu.memory_space<vmem>>, vector<1x32x32xf32>,
    } else {
    }
    return
  }
  func.func @transform_0(%arg0: i32, %arg1: i32, %arg2: i32) -> i32 {
    %c0_i32 = arith.constant 0 : i32
    %c0_i32_0 = arith.constant 0 : i32
    return %c0_i32 : i32
  }
  func.func @transform_1(%arg0: i32, %arg1: i32, %arg2: i32) -> (i32, i32, i32) {
    %c0_i32 = arith.constant 0 : i32
    %c0_i32_0 = arith.constant 0 : i32
    %c0_i32_1 = arith.constant 0 : i32
    return %arg0, %c0_i32, %c0_i32_0 : i32, i32, i32
  }
  func.func @transform_2(%arg0: i32, %arg1: i32, %arg2: i32) -> (i32, i32, i32) {
    %c0_i32 = arith.constant 0 : i32
    %c0_i32_0 = arith.constant 0 : i32
    %c0_i32_1 = arith.constant 0 : i32
    return %arg0, %c0_i32, %c0_i32_0 : i32, i32, i32
  }
  func.func @transform_3(%arg0: i32, %arg1: i32, %arg2: i32) -> (i32, i32, i32) {
    %c0_i32 = arith.constant 0 : i32
    %c0_i32_0 = arith.constant 0 : i32
    %c0_i32_1 = arith.constant 0 : i32
    return %arg2, %c0_i32, %c0_i32_0 : i32, i32, i32
  }
  func.func @transform_4(%arg0: i32, %arg1: i32, %arg2: i32) -> (i32, i32, i32) {
    %c0_i32 = arith.constant 0 : i32
    %c0_i32_0 = arith.constant 0 : i32
    %c0_i32_1 = arith.constant 0 : i32
    return %arg2, %c0_i32, %c0_i32_0 : i32, i32, i32
  }
  func.func @transform_5(%arg0: i32, %arg1: i32, %arg2: i32) -> (i32, i32) {
    %c0_i32 = arith.constant 0 : i32
    %c0_i32_0 = arith.constant 0 : i32
    return %arg1, %c0_i32 : i32, i32
  }
  func.func @transform_6(%arg0: i32, %arg1: i32, %arg2: i32) -> (i32, i32) {
    %c0_i32 = arith.constant 0 : i32
    %c0_i32_0 = arith.constant 0 : i32
    return %arg1, %c0_i32 : i32, i32
  }
  func.func @transform_7(%arg0: i32, %arg1: i32, %arg2: i32) -> (i32, i32) {
    %c0_i32 = arith.constant 0 : i32
    %c0_i32_0 = arith.constant 0 : i32
    %c0_i32_1 = arith.constant 0 : i32
    return %c0_i32, %c0_i32_0 : i32, i32
  }
  func.func @transform_8(%arg0: i32, %arg1: i32, %arg2: i32) -> (i32, i32) {
    %c0_i32 = arith.constant 0 : i32
    %c0_i32_0 = arith.constant 0 : i32
    %c0_i32_1 = arith.constant 0 : i32
    return %c0_i32, %c0_i32_0 : i32, i32
  }
  func.func @transform_9(%arg0: i32, %arg1: i32, %arg2: i32) -> (i32, i32, i32) {
    %c0_i32 = arith.constant 0 : i32
    %c0_i32_0 = arith.constant 0 : i32
    return %arg0, %arg1, %c0_i32 : i32, i32, i32
  }
  func.func @transform_10(%arg0: i32, %arg1: i32, %arg2: i32) -> (i32, i32, i32) {
    %c0_i32 = arith.constant 0 : i32
    %c0_i32_0 = arith.constant 0 : i32
    return %arg0, %arg1, %c0_i32 : i32, i32, i32
  }
}

</mosaic_0001>

<llo_original>
// kernel: tpu_custom_call.1
$region0: #{tpu_custom_call.1}
  #allocation0 [shape = 'u32[]', space=smem, size = 0x4, offset = 0x4, fixed_abs, tag = 'smem constant byte address 0x4 - core index']
  #allocation1 [shape = 'u32[144,128]{1,0:T(1,128)}', space=vmem, size = 0x12000, scoped, tag = 'internal scratch']
  %s0 = inlined_call_operand.vmem [shape: f32[8], index: 0, kind: input, shape index: {}]
  %s1 = inlined_call_operand.vmem [shape: f32[2,128,128], index: 1, kind: input, shape index: {}]
  %s2 = inlined_call_operand.hbm [shape: f32[2,128,128], index: 2, kind: input, shape index: {}]
  %s3 = inlined_call_operand.hbm [shape: f32[8,128,128], index: 3, kind: input, shape index: {}]
  %s4 = inlined_call_operand.hbm [shape: f32[8,128,128], index: 4, kind: input, shape index: {}]
  %s5 = inlined_call_operand.vmem [shape: f32[32,128], index: 5, kind: input, shape index: {}]
  %s6 = inlined_call_operand.vmem [shape: f32[32,128], index: 6, kind: input, shape index: {}]
  %s7 = inlined_call_operand.vmem [shape: f32[128,32], index: 7, kind: input, shape index: {}]
  %s8 = inlined_call_operand.vmem [shape: f32[128,32], index: 8, kind: input, shape index: {}]
  %s9 = inlined_call_operand.hbm [shape: f32[2,32,32], index: 9, kind: output, shape index: {0}]
  %s10 = inlined_call_operand.hbm [shape: f32[2,32,32], index: 10, kind: output, shape index: {1}]
  %11 = xla_tuple %s9, %s10
  %s12 = sld [smem:[#allocation0]]
  $region105: #{tpu_custom_call.1} parent=0
    _
  %s14 = ssub.s32 1, %s12
  %s15 = scalar_select 0, %s14, %s12
  $region1: #{tpu_custom_call.1} parent=0
    #allocation2 [shape = 'u8[512]{0}', space=smem, size = 0x200, scoped, tag = 'input window, operand 0, single buffered']
    #allocation3 [shape = 's32[2]{0}', space=sflag, size = 0x8, scoped, tag = 'scoped memory for tpu_custom_call.1']
    #allocation4 [shape = 's32[2]{0}', space=sflag, size = 0x8, scoped, tag = 'scoped memory for tpu_custom_call.1']
    #allocation5 [shape = 's32[2]{0}', space=sflag, size = 0x8, scoped, tag = 'scoped memory for tpu_custom_call.1']
    #allocation6 [shape = 'u8[131072]{0}', space=vmem, size = 0x20000, scoped, tag = 'input window, operand 2']
    #allocation7 [shape = 'u8[131072]{0}', space=vmem, size = 0x20000, scoped, tag = 'input window, operand 3']
    #allocation8 [shape = 's32[2]{0}', space=sflag, size = 0x8, scoped, tag = 'scoped memory for tpu_custom_call.1']
    #allocation9 [shape = 'u8[131072]{0}', space=vmem, size = 0x20000, scoped, tag = 'input window, operand 4']
    #allocation10 [shape = 'u8[32768]{0}', space=vmem, size = 0x8000, scoped, tag = 'output window, operand 0']
    #allocation11 [shape = 'u8[32768]{0}', space=vmem, size = 0x8000, scoped, tag = 'output window, operand 1']
    #allocation12 [shape = 's32[2]{0}', space=sflag, size = 0x8, scoped, tag = 'scoped memory for tpu_custom_call.1']
    %16 = vsyncpa [#allocation5], 0
    %17 = vsyncpa [#allocation3], 0
    %s18 = scalar_lea.sflag [#allocation3], 1
    %19 = vsyncpa %s18, 0
    %20 = vsyncpa [#allocation8], 0
    %s21 = scalar_lea.sflag [#allocation8], 1
    %22 = vsyncpa %s21, 0
    %23 = vsyncpa [#allocation4], 0
    %s24 = scalar_lea.sflag [#allocation4], 1
    %25 = vsyncpa %s24, 0
    %26 = vsyncpa [#allocation12], 0
    %s27 = scalar_lea.sflag [#allocation12], 1
    %28 = vsyncpa %s27, 0
    loop: start=0, step=1, limit=18
    $region2: #{tpu_custom_call.1} parent=1 // loop_pre_header
      _
    $region3: #{tpu_custom_call.1} parent=1 // loop_header
      %s30 = sphi 0, %s34
      %p31 = scmp.ge.s32.totalorder %s30, 18
      %s37 = sphi 0, %s56
      %s38 = sphi 0, %s52
      %s39 = sphi 0, %s48
      %s40 = sphi 0, %s37
      %s41 = sphi 0, %s38
      %s42 = sphi 0, %s39
      %s43 = sphi 0, %s40
      %s44 = sphi 0, %s41
      %s45 = sphi 0, %s42
      %s57 = sphi 0, %s57
      %s59 = sphi 0, %s57
      %s60 = sphi 0, %s59
      %s74 = sphi 0, %s60
      %s80 = sphi 0, %s82
      %s83 = sphi 0, %s80
      %s84 = sphi 0, %s83
      %s100 = sphi 0, %s84
      %s106 = sphi 0, %s108
      %s109 = sphi 0, %s106
      %s110 = sphi 0, %s109
      %s126 = sphi 0, %s110
      %s132 = sphi 0, %s134
      %s135 = sphi 0, %s132
      %s136 = sphi 0, %s135
      %s152 = sphi 0, %s136
      %s158 = sphi 0, %s160
      %s161 = sphi 0, %s158
      %s162 = sphi 0, %s161
      %s178 = sphi 0, %s162
      %s184 = sphi 0, %s186
      %s187 = sphi 0, %s184
      %s188 = sphi 0, %s187
      %s204 = sphi 0, %s188
      %s210 = sphi 0, %s212
      %s213 = sphi 0, %s210
      %s214 = sphi 0, %s213
      %s230 = sphi 0, %s214
      %s234 = sphi 0, %s234
      %s236 = sphi 0, %s234
      %s237 = sphi 0, %s236
      %s251 = sphi 0, %s237
      %s255 = sphi 0, %s255
      %s257 = sphi 0, %s255
      %s258 = sphi 0, %s257
      %s272 = sphi 0, %s258
      %s280 = sphi 0, %s282
      %s283 = sphi 0, %s280
      %s284 = sphi 0, %s283
      %s300 = sphi 0, %s284
      %s308 = sphi 0, %s310
      %s311 = sphi 0, %s308
      %s312 = sphi 0, %s311
      %s328 = sphi 0, %s312
    $region4: #{tpu_custom_call.1} parent=1 // loop_header_branch
      %33 = sbr.rel (%p31) target = $region8
    $region5: #{tpu_custom_call.1} parent=1 // loop_body
      %s35 = ssub.s32 %s30, 1
      %s36 = ssub.s32 %s30, 2
      %s46 = sadd.s32 1, %s39
      %p47 = scmp.ge.s32.totalorder %s46, 8
      %s48 = scalar_select %p47, 0, %s46
      %s49 = sadd.s32 1, %s38
      %s50 = scalar_select %p47, %s49, %s38
      %p51 = scmp.ge.s32.totalorder %s50, 1
      %s52 = scalar_select %p51, 0, %s50
      %s53 = sadd.s32 1, %s37
      %s54 = scalar_select %p51, %s53, %s37
      %p55 = scmp.ge.s32.totalorder %s54, 2
      %s56 = scalar_select %p55, 0, %s54
      %s58 = sadd.s32 %s57, 1
      %p61 = scmp.eq.s32.totalorder %s30, 15
      %p62 = scmp.ne.s32.totalorder %s57, %s59
      %p63 = scmp.eq.s32.totalorder %s30, 0
      %p64 = por %p62, %p63
      %p65 = scmp.ne.s32.totalorder %s57, %s59
      %p66 = scmp.eq.s32.totalorder %s35, 15
      %p67 = por %p65, %p66
      %p68 = scmp.ne.s32.totalorder %s59, %s60
      %p69 = scmp.eq.s32.totalorder %s35, 0
      %p70 = por %p68, %p69
      %p71 = scmp.ne.s32.totalorder %s59, %s60
      %p72 = scmp.eq.s32.totalorder %s36, 15
      %p73 = por %p71, %p72
      %p75 = scmp.ne.s32.totalorder %s60, %s74
      %p76 = scmp.eq.s32.totalorder %s36, 0
      %p77 = por %p75, %p76
      %s78 = ssub.s32 %s37, %s56
      %p79 = scmp.eq.s32.totalorder %s78, 0
      %s81 = sadd.s32 %s80, 1
      %s82 = scalar_select %p79, %s80, %s81
      %p85 = pneg %p79
      %p86 = scmp.eq.s32.totalorder %s30, 15
      %p87 = por %p85, %p86
      %p88 = scmp.ne.s32.totalorder %s80, %s83
      %p89 = scmp.eq.s32.totalorder %s30, 0
      %p90 = por %p88, %p89
      %p91 = scmp.ne.s32.totalorder %s80, %s83
      %p92 = scmp.eq.s32.totalorder %s35, 15
      %p93 = por %p91, %p92
      %p94 = scmp.ne.s32.totalorder %s83, %s84
      %p95 = scmp.eq.s32.totalorder %s35, 0
      %p96 = por %p94, %p95
      %p97 = scmp.ne.s32.totalorder %s83, %s84
      %p98 = scmp.eq.s32.totalorder %s36, 15
      %p99 = por %p97, %p98
      %p101 = scmp.ne.s32.totalorder %s84, %s100
      %p102 = scmp.eq.s32.totalorder %s36, 0
      %p103 = por %p101, %p102
      %s104 = ssub.s32 %s37, %s56
      %p105 = scmp.eq.s32.totalorder %s104, 0
      %s107 = sadd.s32 %s106, 1
      %s108 = scalar_select %p105, %s106, %s107
      %p111 = pneg %p105
      %p112 = scmp.eq.s32.totalorder %s30, 15
      %p113 = por %p111, %p112
      %p114 = scmp.ne.s32.totalorder %s106, %s109
      %p115 = scmp.eq.s32.totalorder %s30, 0
      %p116 = por %p114, %p115
      %p117 = scmp.ne.s32.totalorder %s106, %s109
      %p118 = scmp.eq.s32.totalorder %s35, 15
      %p119 = por %p117, %p118
      %p120 = scmp.ne.s32.totalorder %s109, %s110
      %p121 = scmp.eq.s32.totalorder %s35, 0
      %p122 = por %p120, %p121
      %p123 = scmp.ne.s32.totalorder %s109, %s110
      %p124 = scmp.eq.s32.totalorder %s36, 15
      %p125 = por %p123, %p124
      %p127 = scmp.ne.s32.totalorder %s110, %s126
      %p128 = scmp.eq.s32.totalorder %s36, 0
      %p129 = por %p127, %p128
      %s130 = ssub.s32 %s39, %s48
      %p131 = scmp.eq.s32.totalorder %s130, 0
      %s133 = sadd.s32 %s132, 1
      %s134 = scalar_select %p131, %s132, %s133
      %p137 = pneg %p131
      %p138 = scmp.eq.s32.totalorder %s30, 15
      %p139 = por %p137, %p138
      %p140 = scmp.ne.s32.totalorder %s132, %s135
      %p141 = scmp.eq.s32.totalorder %s30, 0
      %p142 = por %p140, %p141
      %p143 = scmp.ne.s32.totalorder %s132, %s135
      %p144 = scmp.eq.s32.totalorder %s35, 15
      %p145 = por %p143, %p144
      %p146 = scmp.ne.s32.totalorder %s135, %s136
      %p147 = scmp.eq.s32.totalorder %s35, 0
      %p148 = por %p146, %p147
      %p149 = scmp.ne.s32.totalorder %s135, %s136
      %p150 = scmp.eq.s32.totalorder %s36, 15
      %p151 = por %p149, %p150
      %p153 = scmp.ne.s32.totalorder %s136, %s152
      %p154 = scmp.eq.s32.totalorder %s36, 0
      %p155 = por %p153, %p154
      %s156 = ssub.s32 %s39, %s48
      %p157 = scmp.eq.s32.totalorder %s156, 0
      %s159 = sadd.s32 %s158, 1
      %s160 = scalar_select %p157, %s158, %s159
      %p163 = pneg %p157
      %p164 = scmp.eq.s32.totalorder %s30, 15
      %p165 = por %p163, %p164
      %p166 = scmp.ne.s32.totalorder %s158, %s161
      %p167 = scmp.eq.s32.totalorder %s30, 0
      %p168 = por %p166, %p167
      %p169 = scmp.ne.s32.totalorder %s158, %s161
      %p170 = scmp.eq.s32.totalorder %s35, 15
      %p171 = por %p169, %p170
      %p172 = scmp.ne.s32.totalorder %s161, %s162
      %p173 = scmp.eq.s32.totalorder %s35, 0
      %p174 = por %p172, %p173
      %p175 = scmp.ne.s32.totalorder %s161, %s162
      %p176 = scmp.eq.s32.totalorder %s36, 15
      %p177 = por %p175, %p176
      %p179 = scmp.ne.s32.totalorder %s162, %s178
      %p180 = scmp.eq.s32.totalorder %s36, 0
      %p181 = por %p179, %p180
      %s182 = ssub.s32 %s38, %s52
      %p183 = scmp.eq.s32.totalorder %s182, 0
      %s185 = sadd.s32 %s184, 1
      %s186 = scalar_select %p183, %s184, %s185
      %p189 = pneg %p183
      %p190 = scmp.eq.s32.totalorder %s30, 15
      %p191 = por %p189, %p190
      %p192 = scmp.ne.s32.totalorder %s184, %s187
      %p193 = scmp.eq.s32.totalorder %s30, 0
      %p194 = por %p192, %p193
      %p195 = scmp.ne.s32.totalorder %s184, %s187
      %p196 = scmp.eq.s32.totalorder %s35, 15
      %p197 = por %p195, %p196
      %p198 = scmp.ne.s32.totalorder %s187, %s188
      %p199 = scmp.eq.s32.totalorder %s35, 0
      %p200 = por %p198, %p199
      %p201 = scmp.ne.s32.totalorder %s187, %s188
      %p202 = scmp.eq.s32.totalorder %s36, 15
      %p203 = por %p201, %p202
      %p205 = scmp.ne.s32.totalorder %s188, %s204
      %p206 = scmp.eq.s32.totalorder %s36, 0
      %p207 = por %p205, %p206
      %s208 = ssub.s32 %s38, %s52
      %p209 = scmp.eq.s32.totalorder %s208, 0
      %s211 = sadd.s32 %s210, 1
      %s212 = scalar_select %p209, %s210, %s211
      %p215 = pneg %p209
      %p216 = scmp.eq.s32.totalorder %s30, 15
      %p217 = por %p215, %p216
      %p218 = scmp.ne.s32.totalorder %s210, %s213
      %p219 = scmp.eq.s32.totalorder %s30, 0
      %p220 = por %p218, %p219
      %p221 = scmp.ne.s32.totalorder %s210, %s213
      %p222 = scmp.eq.s32.totalorder %s35, 15
      %p223 = por %p221, %p222
      %p224 = scmp.ne.s32.totalorder %s213, %s214
      %p225 = scmp.eq.s32.totalorder %s35, 0
      %p226 = por %p224, %p225
      %p227 = scmp.ne.s32.totalorder %s213, %s214
      %p228 = scmp.eq.s32.totalorder %s36, 15
      %p229 = por %p227, %p228
      %p231 = scmp.ne.s32.totalorder %s214, %s230
      %p232 = scmp.eq.s32.totalorder %s36, 0
      %p233 = por %p231, %p232
      %s235 = sadd.s32 %s234, 1
      %p238 = scmp.eq.s32.totalorder %s30, 15
      %p239 = scmp.ne.s32.totalorder %s234, %s236
      %p240 = scmp.eq.s32.totalorder %s30, 0
      %p241 = por %p239, %p240
      %p242 = scmp.ne.s32.totalorder %s234, %s236
      %p243 = scmp.eq.s32.totalorder %s35, 15
      %p244 = por %p242, %p243
      %p245 = scmp.ne.s32.totalorder %s236, %s237
      %p246 = scmp.eq.s32.totalorder %s35, 0
      %p247 = por %p245, %p246
      %p248 = scmp.ne.s32.totalorder %s236, %s237
      %p249 = scmp.eq.s32.totalorder %s36, 15
      %p250 = por %p248, %p249
      %p252 = scmp.ne.s32.totalorder %s237, %s251
      %p253 = scmp.eq.s32.totalorder %s36, 0
      %p254 = por %p252, %p253
      %s256 = sadd.s32 %s255, 1
      %p259 = scmp.eq.s32.totalorder %s30, 15
      %p260 = scmp.ne.s32.totalorder %s255, %s257
      %p261 = scmp.eq.s32.totalorder %s30, 0
      %p262 = por %p260, %p261
      %p263 = scmp.ne.s32.totalorder %s255, %s257
      %p264 = scmp.eq.s32.totalorder %s35, 15
      %p265 = por %p263, %p264
      %p266 = scmp.ne.s32.totalorder %s257, %s258
      %p267 = scmp.eq.s32.totalorder %s35, 0
      %p268 = por %p266, %p267
      %p269 = scmp.ne.s32.totalorder %s257, %s258
      %p270 = scmp.eq.s32.totalorder %s36, 15
      %p271 = por %p269, %p270
      %p273 = scmp.ne.s32.totalorder %s258, %s272
      %p274 = scmp.eq.s32.totalorder %s36, 0
      %p275 = por %p273, %p274
      %s276 = ssub.s32 %s37, %s56
      %s277 = ssub.s32 %s38, %s52
      %s278 = sor.u32 %s276, %s277
      %p279 = scmp.eq.s32.totalorder %s278, 0
      %s281 = sadd.s32 %s280, 1
      %s282 = scalar_select %p279, %s280, %s281
      %p285 = pneg %p279
      %p286 = scmp.eq.s32.totalorder %s30, 15
      %p287 = por %p285, %p286
      %p288 = scmp.ne.s32.totalorder %s280, %s283
      %p289 = scmp.eq.s32.totalorder %s30, 0
      %p290 = por %p288, %p289
      %p291 = scmp.ne.s32.totalorder %s280, %s283
      %p292 = scmp.eq.s32.totalorder %s35, 15
      %p293 = por %p291, %p292
      %p294 = scmp.ne.s32.totalorder %s283, %s284
      %p295 = scmp.eq.s32.totalorder %s35, 0
      %p296 = por %p294, %p295
      %p297 = scmp.ne.s32.totalorder %s283, %s284
      %p298 = scmp.eq.s32.totalorder %s36, 15
      %p299 = por %p297, %p298
      %p301 = scmp.ne.s32.totalorder %s284, %s300
      %p302 = scmp.eq.s32.totalorder %s36, 0
      %p303 = por %p301, %p302
      %s304 = ssub.s32 %s37, %s56
      %s305 = ssub.s32 %s38, %s52
      %s306 = sor.u32 %s304, %s305
      %p307 = scmp.eq.s32.totalorder %s306, 0
      %s309 = sadd.s32 %s308, 1
      %s310 = scalar_select %p307, %s308, %s309
      %p313 = pneg %p307
      %p314 = scmp.eq.s32.totalorder %s30, 15
      %p315 = por %p313, %p314
      %p316 = scmp.ne.s32.totalorder %s308, %s311
      %p317 = scmp.eq.s32.totalorder %s30, 0
      %p318 = por %p316, %p317
      %p319 = scmp.ne.s32.totalorder %s308, %s311
      %p320 = scmp.eq.s32.totalorder %s35, 15
      %p321 = por %p319, %p320
      %p322 = scmp.ne.s32.totalorder %s311, %s312
      %p323 = scmp.eq.s32.totalorder %s35, 0
      %p324 = por %p322, %p323
      %p325 = scmp.ne.s32.totalorder %s311, %s312
      %p326 = scmp.eq.s32.totalorder %s36, 15
      %p327 = por %p325, %p326
      %p329 = scmp.ne.s32.totalorder %s312, %s328
      %p330 = scmp.eq.s32.totalorder %s36, 0
      %p331 = por %p329, %p330
      %p332 = scmp.le.s32.totalorder 1, %s30
      %p333 = scmp.lt.s32.totalorder %s30, 17
      %p334 = pnand %p332, %p333
      %p335 = pneg %p334
      // Predicated region
      $region9: #{tpu_custom_call.1} parent=5 // pred_check
        _
      $region10: #{tpu_custom_call.1} parent=5 // pred_check_branch
        %337 = sbr.rel (%p334) target = $region12
      $region11: #{tpu_custom_call.1} parent=5 // pred_region
        %s338 = ssub.s32 %s30, 1
        // Predicated region
        $region13: #{tpu_custom_call.1} parent=11 // pred_check
          %p339 = pneg %p70
        $region14: #{tpu_custom_call.1} parent=11 // pred_check_branch
          %341 = sbr.rel (%p339) target = $region16
        $region15: #{tpu_custom_call.1} parent=11 // pred_region
          %s343 = ssub.s32 16, 16
          %344 = vsyncadd [#allocation5], %s343
          %s346 = sshll.u32 %s0, 4
          %s347 = int_to_ptr.vmem [resolvable:$true] %s346
          %349 = dma.vmem_to_smem %s347, 16, [#allocation2], [#allocation5]
        $region16: #{tpu_custom_call.1} parent=11 // pred_fallthru
          _
        // Predicated region
        $region17: #{tpu_custom_call.1} parent=11 // pred_check
          %p350 = pneg %p200
        $region18: #{tpu_custom_call.1} parent=11 // pred_check_branch
          %352 = sbr.rel (%p350) target = $region20
        $region19: #{tpu_custom_call.1} parent=11 // pred_region
          %s353 = smul.u32 4, %s41
          %p354 = scmp.lt.s32.totalorder %s353, 3
          %s355 = scalar_select %p354, %s353, 3
          %s356 = smul.addr %s355, 8
          %s357 = scalar_lea.vmem %s5, %s356
          %s358 = smul.u32 4, %s41
        $region20: #{tpu_custom_call.1} parent=11 // pred_fallthru
          _
        // Predicated region
        $region21: #{tpu_custom_call.1} parent=11 // pred_check
          %p359 = pneg %p226
        $region22: #{tpu_custom_call.1} parent=11 // pred_check_branch
          %361 = sbr.rel (%p359) target = $region24
        $region23: #{tpu_custom_call.1} parent=11 // pred_region
          %s362 = smul.u32 4, %s41
          %p363 = scmp.lt.s32.totalorder %s362, 3
          %s364 = scalar_select %p363, %s362, 3
          %s365 = smul.addr %s364, 8
          %s366 = scalar_lea.vmem %s6, %s365
          %s367 = smul.u32 4, %s41
        $region24: #{tpu_custom_call.1} parent=11 // pred_fallthru
          _
        // Predicated region
        $region25: #{tpu_custom_call.1} parent=11 // pred_check
          %p368 = pneg %p247
        $region26: #{tpu_custom_call.1} parent=11 // pred_check_branch
          %370 = sbr.rel (%p368) target = $region28
        $region27: #{tpu_custom_call.1} parent=11 // pred_region
          _
        $region28: #{tpu_custom_call.1} parent=11 // pred_fallthru
          _
        // Predicated region
        $region29: #{tpu_custom_call.1} parent=11 // pred_check
          %p371 = pneg %p268
        $region30: #{tpu_custom_call.1} parent=11 // pred_check_branch
          %373 = sbr.rel (%p371) target = $region32
        $region31: #{tpu_custom_call.1} parent=11 // pred_region
          _
        $region32: #{tpu_custom_call.1} parent=11 // pred_fallthru
          _
      $region12: #{tpu_custom_call.1} parent=5 // pred_fallthru
        _
      %p374 = scmp.lt.s32.totalorder %s30, 16
      // Predicated region
      $region33: #{tpu_custom_call.1} parent=5 // pred_check
        %p375 = pneg %p374
      $region34: #{tpu_custom_call.1} parent=5 // pred_check_branch
        %377 = sbr.rel (%p375) target = $region36
      $region35: #{tpu_custom_call.1} parent=5 // pred_region
        // Predicated region
        $region37: #{tpu_custom_call.1} parent=35 // pred_check
          %p378 = pneg %p90
        $region38: #{tpu_custom_call.1} parent=35 // pred_check_branch
          %380 = sbr.rel (%p378) target = $region40
        $region39: #{tpu_custom_call.1} parent=35 // pred_region
          %p381 = scmp.lt.s32.totalorder %s37, 1
          %s382 = scalar_select %p381, %s37, 1
          %s383 = smul.addr %s382, 16
          %s384 = smul.addr %s383, 8
          %s385 = scalar_lea.vmem %s1, %s384
        $region40: #{tpu_custom_call.1} parent=35 // pred_fallthru
          _
        // Predicated region
        $region41: #{tpu_custom_call.1} parent=35 // pred_check
          %p386 = pneg %p116
        $region42: #{tpu_custom_call.1} parent=35 // pred_check_branch
          %388 = sbr.rel (%p386) target = $region44
        $region43: #{tpu_custom_call.1} parent=35 // pred_region
          %s389 = sand.u32 %s106, 1
          %s390 = scalar_lea.sflag [#allocation3], %s389
          %s391 = sand.u32 %s106, 1
          %s392 = smul.addr %s391, 128
          %s393 = scalar_lea.vmem [#allocation6], %s392
          %s395 = ssub.s32 2048, 2048
          %396 = vsyncadd %s390, %s395
          %s397 = smul.addr %s37, 16
          %s398 = smul.addr %s397, 128
          %s399 = scalar_lea.hbm %s2, %s398
          %s400 = sshll.u32 %s393, 4
          %s401 = int_to_ptr.vmem [resolvable:$true] %s400
          %406 = dma.hbm_to_vmem [thread:$0]  %s399, 2048, %s401, %s390, 128, 128, 8
        $region44: #{tpu_custom_call.1} parent=35 // pred_fallthru
          _
        // Predicated region
        $region45: #{tpu_custom_call.1} parent=35 // pred_check
          %p407 = pneg %p142
        $region46: #{tpu_custom_call.1} parent=35 // pred_check_branch
          %409 = sbr.rel (%p407) target = $region48
        $region47: #{tpu_custom_call.1} parent=35 // pred_region
          %s410 = sand.u32 %s30, 1
          %s411 = scalar_lea.sflag [#allocation8], %s410
          %s412 = sand.u32 %s132, 1
          %s413 = smul.addr %s412, 128
          %s414 = scalar_lea.vmem [#allocation7], %s413
          %s416 = ssub.s32 2048, 2048
          %417 = vsyncadd %s411, %s416
          %s418 = smul.addr %s39, 16
          %s419 = smul.addr %s418, 128
          %s420 = scalar_lea.hbm %s3, %s419
          %s421 = sshll.u32 %s414, 4
          %s422 = int_to_ptr.vmem [resolvable:$true] %s421
          %427 = dma.hbm_to_vmem [thread:$0]  %s420, 2048, %s422, %s411, 128, 128, 8
        $region48: #{tpu_custom_call.1} parent=35 // pred_fallthru
          _
        // Predicated region
        $region49: #{tpu_custom_call.1} parent=35 // pred_check
          %p428 = pneg %p168
        $region50: #{tpu_custom_call.1} parent=35 // pred_check_branch
          %430 = sbr.rel (%p428) target = $region52
        $region51: #{tpu_custom_call.1} parent=35 // pred_region
          %s431 = sand.u32 %s30, 1
          %s432 = scalar_lea.sflag [#allocation8], %s431
          %s433 = sand.u32 %s158, 1
          %s434 = smul.addr %s433, 128
          %s435 = scalar_lea.vmem [#allocation9], %s434
          %s437 = ssub.s32 2048, 2048
          %438 = vsyncadd %s432, %s437
          %s439 = smul.addr %s39, 16
          %s440 = smul.addr %s439, 128
          %s441 = scalar_lea.hbm %s4, %s440
          %s442 = sshll.u32 %s435, 4
          %s443 = int_to_ptr.vmem [resolvable:$true] %s442
          %448 = dma.hbm_to_vmem [thread:$0]  %s441, 2048, %s443, %s432, 128, 128, 8
        $region52: #{tpu_custom_call.1} parent=35 // pred_fallthru
          _
      $region36: #{tpu_custom_call.1} parent=5 // pred_fallthru
        _
      %p449 = scmp.le.s32.totalorder 1, %s30
      %p450 = scmp.lt.s32.totalorder %s30, 17
      %p451 = pnand %p449, %p450
      %p452 = pneg %p451
      // Predicated region
      $region53: #{tpu_custom_call.1} parent=5 // pred_check
        _
      $region54: #{tpu_custom_call.1} parent=5 // pred_check_branch
        %454 = sbr.rel (%p451) target = $region56
      $region55: #{tpu_custom_call.1} parent=5 // pred_region
        %s455 = ssub.s32 %s30, 1
        // Predicated region
        $region57: #{tpu_custom_call.1} parent=55 // pred_check
          %p456 = pneg %p70
        $region58: #{tpu_custom_call.1} parent=55 // pred_check_branch
          %458 = sbr.rel (%p456) target = $region60
        $region59: #{tpu_custom_call.1} parent=55 // pred_region
          %459 = dma.done [#allocation5], 16
        $region60: #{tpu_custom_call.1} parent=55 // pred_fallthru
          _
        %s460 = sand.u32 %s109, 1
        %s461 = scalar_lea.sflag [#allocation3], %s460
        %s462 = sand.u32 %s109, 1
        %s463 = smul.addr %s462, 128
        %s464 = scalar_lea.vmem [#allocation6], %s463
        // Predicated region
        $region61: #{tpu_custom_call.1} parent=55 // pred_check
          %p465 = pneg %p122
        $region62: #{tpu_custom_call.1} parent=55 // pred_check_branch
          %467 = sbr.rel (%p465) target = $region64
        $region63: #{tpu_custom_call.1} parent=55 // pred_region
          %468 = dma.done %s461, 2048
        $region64: #{tpu_custom_call.1} parent=55 // pred_fallthru
          _
        %s469 = sand.u32 %s35, 1
        %s470 = scalar_lea.sflag [#allocation8], %s469
        %s471 = sand.u32 %s135, 1
        %s472 = smul.addr %s471, 128
        %s473 = scalar_lea.vmem [#allocation7], %s472
        // Predicated region
        $region65: #{tpu_custom_call.1} parent=55 // pred_check
          %p474 = pneg %p148
        $region66: #{tpu_custom_call.1} parent=55 // pred_check_branch
          %476 = sbr.rel (%p474) target = $region68
        $region67: #{tpu_custom_call.1} parent=55 // pred_region
          %477 = dma.done %s470, 2048
        $region68: #{tpu_custom_call.1} parent=55 // pred_fallthru
          _
        %s478 = sand.u32 %s35, 1
        %s479 = scalar_lea.sflag [#allocation8], %s478
        %s480 = sand.u32 %s161, 1
        %s481 = smul.addr %s480, 128
        %s482 = scalar_lea.vmem [#allocation9], %s481
        // Predicated region
        $region69: #{tpu_custom_call.1} parent=55 // pred_check
          %p483 = pneg %p174
        $region70: #{tpu_custom_call.1} parent=55 // pred_check_branch
          %485 = sbr.rel (%p483) target = $region72
        $region71: #{tpu_custom_call.1} parent=55 // pred_region
          %486 = dma.done %s479, 2048
        $region72: #{tpu_custom_call.1} parent=55 // pred_fallthru
          _
        %487 = sfence
        %p488 = pneg %p70
        %p489 = pneg %p67
        %p490 = scmp.lt.s32.totalorder %s40, 1
        %s491 = scalar_select %p490, %s40, 1
        %s492 = smul.addr %s491, 16
        %s493 = smul.addr %s492, 8
        %s494 = scalar_lea.vmem %s1, %s493
        %p495 = pneg %p96
        %p496 = pneg %p93
        %s497 = sand.u32 %s109, 1
        %s498 = scalar_lea.sflag [#allocation3], %s497
        %s499 = sand.u32 %s109, 1
        %s500 = smul.addr %s499, 128
        %s501 = scalar_lea.vmem [#allocation6], %s500
        %p502 = pneg %p122
        %p503 = pneg %p119
        %s504 = sand.u32 %s35, 1
        %s505 = scalar_lea.sflag [#allocation8], %s504
        %s506 = sand.u32 %s135, 1
        %s507 = smul.addr %s506, 128
        %s508 = scalar_lea.vmem [#allocation7], %s507
        %p509 = pneg %p148
        %p510 = pneg %p145
        %s511 = sand.u32 %s35, 1
        %s512 = scalar_lea.sflag [#allocation8], %s511
        %s513 = sand.u32 %s161, 1
        %s514 = smul.addr %s513, 128
        %s515 = scalar_lea.vmem [#allocation9], %s514
        %p516 = pneg %p174
        %p517 = pneg %p171
        %s518 = smul.u32 4, %s41
        %p519 = scmp.lt.s32.totalorder %s518, 3
        %s520 = scalar_select %p519, %s518, 3
        %s521 = smul.addr %s520, 8
        %s522 = scalar_lea.vmem %s5, %s521
        %p523 = pneg %p200
        %p524 = pneg %p197
        %s525 = smul.u32 4, %s41
        %p526 = scmp.lt.s32.totalorder %s525, 3
        %s527 = scalar_select %p526, %s525, 3
        %s528 = smul.addr %s527, 8
        %s529 = scalar_lea.vmem %s6, %s528
        %p530 = pneg %p226
        %p531 = pneg %p223
        %p532 = pneg %p247
        %p533 = pneg %p244
        %p534 = pneg %p268
        %p535 = pneg %p265
        %p536 = pneg %p296
        %p537 = pneg %p293
        %s538 = sand.u32 %s283, 1
        %s539 = scalar_lea.sflag [#allocation4], %s538
        %s540 = sand.u32 %s283, 1
        %s541 = smul.addr %s540, 32
        %s542 = scalar_lea.vmem [#allocation10], %s541
        %p543 = pneg %p324
        %p544 = pneg %p321
        %s545 = sand.u32 %s311, 1
        %s546 = scalar_lea.sflag [#allocation12], %s545
        %s547 = sand.u32 %s311, 1
        %s548 = smul.addr %s547, 32
        %s549 = scalar_lea.vmem [#allocation11], %s548
        %p550 = scmp.lt.s32.totalorder %s40, 1
        %s551 = scalar_select %p550, %s40, 1
        %s552 = smul.addr %s551, 16
        %s553 = smul.addr %s552, 8
        %s554 = scalar_lea.vmem %s1, %s553
        %s555 = smul.u32 4, %s41
        %p556 = scmp.lt.s32.totalorder %s555, 3
        %s557 = scalar_select %p556, %s555, 3
        %s558 = smul.addr %s557, 8
        %s559 = scalar_lea.vmem %s5, %s558
        %s560 = smul.u32 4, %s41
        %s561 = smul.u32 4, %s41
        %p562 = scmp.lt.s32.totalorder %s561, 3
        %s563 = scalar_select %p562, %s561, 3
        %s564 = smul.addr %s563, 8
        %s565 = scalar_lea.vmem %s6, %s564
        %s566 = smul.u32 4, %s41
        %s567 = smul.u32 4, %s41
        %s568 = smul.u32 4, %s41
        %v569 = vld [vmem:[%s554] sm:$0xff]
        %v570 = vld [vmem:[%s554 + $0x8] sm:$0xff]
        %v571 = vld [vmem:[%s554 + $0x10] sm:$0xff]
        %v572 = vld [vmem:[%s554 + $0x18] sm:$0xff]
        %v573 = vld [vmem:[%s554 + $0x20] sm:$0xff]
        %v574 = vld [vmem:[%s554 + $0x28] sm:$0xff]
        %v575 = vld [vmem:[%s554 + $0x30] sm:$0xff]
        %v576 = vld [vmem:[%s554 + $0x38] sm:$0xff]
        %v577 = vld [vmem:[%s554 + $0x40] sm:$0xff]
        %v578 = vld [vmem:[%s554 + $0x48] sm:$0xff]
        %v579 = vld [vmem:[%s554 + $0x50] sm:$0xff]
        %v580 = vld [vmem:[%s554 + $0x58] sm:$0xff]
        %v581 = vld [vmem:[%s554 + $0x60] sm:$0xff]
        %v582 = vld [vmem:[%s554 + $0x68] sm:$0xff]
        %v583 = vld [vmem:[%s554 + $0x70] sm:$0xff]
        %v584 = vld [vmem:[%s554 + $0x78] sm:$0xff]
        %v585 = vld [vmem:[%s464] sm:$0xff]
        %v586 = vld [vmem:[%s464 + $0x8] sm:$0xff]
        %v587 = vld [vmem:[%s464 + $0x10] sm:$0xff]
        %v588 = vld [vmem:[%s464 + $0x18] sm:$0xff]
        %v589 = vld [vmem:[%s464 + $0x20] sm:$0xff]
        %v590 = vld [vmem:[%s464 + $0x28] sm:$0xff]
        %v591 = vld [vmem:[%s464 + $0x30] sm:$0xff]
        %v592 = vld [vmem:[%s464 + $0x38] sm:$0xff]
        %v593 = vld [vmem:[%s464 + $0x40] sm:$0xff]
        %v594 = vld [vmem:[%s464 + $0x48] sm:$0xff]
        %v595 = vld [vmem:[%s464 + $0x50] sm:$0xff]
        %v596 = vld [vmem:[%s464 + $0x58] sm:$0xff]
        %v597 = vld [vmem:[%s464 + $0x60] sm:$0xff]
        %v598 = vld [vmem:[%s464 + $0x68] sm:$0xff]
        %v599 = vld [vmem:[%s464 + $0x70] sm:$0xff]
        %v600 = vld [vmem:[%s464 + $0x78] sm:$0xff]
        %v601 = vld [vmem:[%s473] sm:$0xff]
        %v602 = vld [vmem:[%s473 + $0x8] sm:$0xff]
        %v603 = vld [vmem:[%s473 + $0x10] sm:$0xff]
        %v604 = vld [vmem:[%s473 + $0x18] sm:$0xff]
        %v605 = vld [vmem:[%s473 + $0x20] sm:$0xff]
        %v606 = vld [vmem:[%s473 + $0x28] sm:$0xff]
        %v607 = vld [vmem:[%s473 + $0x30] sm:$0xff]
        %v608 = vld [vmem:[%s473 + $0x38] sm:$0xff]
        %v609 = vld [vmem:[%s473 + $0x40] sm:$0xff]
        %v610 = vld [vmem:[%s473 + $0x48] sm:$0xff]
        %v611 = vld [vmem:[%s473 + $0x50] sm:$0xff]
        %v612 = vld [vmem:[%s473 + $0x58] sm:$0xff]
        %v613 = vld [vmem:[%s473 + $0x60] sm:$0xff]
        %v614 = vld [vmem:[%s473 + $0x68] sm:$0xff]
        %v615 = vld [vmem:[%s473 + $0x70] sm:$0xff]
        %v616 = vld [vmem:[%s473 + $0x78] sm:$0xff]
        %v617 = vld [vmem:[%s482] sm:$0xff]
        %v618 = vld [vmem:[%s482 + $0x8] sm:$0xff]
        %v619 = vld [vmem:[%s482 + $0x10] sm:$0xff]
        %v620 = vld [vmem:[%s482 + $0x18] sm:$0xff]
        %v621 = vld [vmem:[%s482 + $0x20] sm:$0xff]
        %v622 = vld [vmem:[%s482 + $0x28] sm:$0xff]
        %v623 = vld [vmem:[%s482 + $0x30] sm:$0xff]
        %v624 = vld [vmem:[%s482 + $0x38] sm:$0xff]
        %v625 = vld [vmem:[%s482 + $0x40] sm:$0xff]
        %v626 = vld [vmem:[%s482 + $0x48] sm:$0xff]
        %v627 = vld [vmem:[%s482 + $0x50] sm:$0xff]
        %v628 = vld [vmem:[%s482 + $0x58] sm:$0xff]
        %v629 = vld [vmem:[%s482 + $0x60] sm:$0xff]
        %v630 = vld [vmem:[%s482 + $0x68] sm:$0xff]
        %v631 = vld [vmem:[%s482 + $0x70] sm:$0xff]
        %v632 = vld [vmem:[%s482 + $0x78] sm:$0xff]
        %v633 = vmul.f32 %v569, %v601
        %v634 = vmul.f32 %v570, %v602
        %v635 = vmul.f32 %v571, %v603
        %v636 = vmul.f32 %v572, %v604
        %v637 = vmul.f32 %v573, %v605
        %v638 = vmul.f32 %v574, %v606
        %v639 = vmul.f32 %v575, %v607
        %v640 = vmul.f32 %v576, %v608
        %v641 = vmul.f32 %v577, %v609
        %v642 = vmul.f32 %v578, %v610
        %v643 = vmul.f32 %v579, %v611
        %v644 = vmul.f32 %v580, %v612
        %v645 = vmul.f32 %v581, %v613
        %v646 = vmul.f32 %v582, %v614
        %v647 = vmul.f32 %v583, %v615
        %v648 = vmul.f32 %v584, %v616
        %v649 = vmul.f32 %v585, %v617
        %v650 = vmul.f32 %v586, %v618
        %v651 = vmul.f32 %v587, %v619
        %v652 = vmul.f32 %v588, %v620
        %v653 = vmul.f32 %v589, %v621
        %v654 = vmul.f32 %v590, %v622
        %v655 = vmul.f32 %v591, %v623
        %v656 = vmul.f32 %v592, %v624
        %v657 = vmul.f32 %v593, %v625
        %v658 = vmul.f32 %v594, %v626
        %v659 = vmul.f32 %v595, %v627
        %v660 = vmul.f32 %v596, %v628
        %v661 = vmul.f32 %v597, %v629
        %v662 = vmul.f32 %v598, %v630
        %v663 = vmul.f32 %v599, %v631
        %v664 = vmul.f32 %v600, %v632
        %v665 = vsub.f32 %v633, %v649
        %v666 = vsub.f32 %v634, %v650
        %v667 = vsub.f32 %v635, %v651
        %v668 = vsub.f32 %v636, %v652
        %v669 = vsub.f32 %v637, %v653
        %v670 = vsub.f32 %v638, %v654
        %v671 = vsub.f32 %v639, %v655
        %v672 = vsub.f32 %v640, %v656
        %v673 = vsub.f32 %v641, %v657
        %v674 = vsub.f32 %v642, %v658
        %v675 = vsub.f32 %v643, %v659
        %v676 = vsub.f32 %v644, %v660
        %v677 = vsub.f32 %v645, %v661
        %v678 = vsub.f32 %v646, %v662
        %v679 = vsub.f32 %v647, %v663
        %v680 = vsub.f32 %v648, %v664
        %v681 = vmul.f32 %v569, %v617
        %v682 = vmul.f32 %v570, %v618
        %v683 = vmul.f32 %v571, %v619
        %v684 = vmul.f32 %v572, %v620
        %v685 = vmul.f32 %v573, %v621
        %v686 = vmul.f32 %v574, %v622
        %v687 = vmul.f32 %v575, %v623
        %v688 = vmul.f32 %v576, %v624
        %v689 = vmul.f32 %v577, %v625
        %v690 = vmul.f32 %v578, %v626
        %v691 = vmul.f32 %v579, %v627
        %v692 = vmul.f32 %v580, %v628
        %v693 = vmul.f32 %v581, %v629
        %v694 = vmul.f32 %v582, %v630
        %v695 = vmul.f32 %v583, %v631
        %v696 = vmul.f32 %v584, %v632
        %v697 = vmul.f32 %v585, %v601
        %v698 = vmul.f32 %v586, %v602
        %v699 = vmul.f32 %v587, %v603
        %v700 = vmul.f32 %v588, %v604
        %v701 = vmul.f32 %v589, %v605
        %v702 = vmul.f32 %v590, %v606
        %v703 = vmul.f32 %v591, %v607
        %v704 = vmul.f32 %v592, %v608
        %v705 = vmul.f32 %v593, %v609
        %v706 = vmul.f32 %v594, %v610
        %v707 = vmul.f32 %v595, %v611
        %v708 = vmul.f32 %v596, %v612
        %v709 = vmul.f32 %v597, %v613
        %v710 = vmul.f32 %v598, %v614
        %v711 = vmul.f32 %v599, %v615
        %v712 = vmul.f32 %v600, %v616
        %v713 = vadd.f32 %v681, %v697
        %v714 = vadd.f32 %v682, %v698
        %v715 = vadd.f32 %v683, %v699
        %v716 = vadd.f32 %v684, %v700
        %v717 = vadd.f32 %v685, %v701
        %v718 = vadd.f32 %v686, %v702
        %v719 = vadd.f32 %v687, %v703
        %v720 = vadd.f32 %v688, %v704
        %v721 = vadd.f32 %v689, %v705
        %v722 = vadd.f32 %v690, %v706
        %v723 = vadd.f32 %v691, %v707
        %v724 = vadd.f32 %v692, %v708
        %v725 = vadd.f32 %v693, %v709
        %v726 = vadd.f32 %v694, %v710
        %v727 = vadd.f32 %v695, %v711
        %v728 = vadd.f32 %v696, %v712
        %v729 = vld [vmem:[%s559] sm:$0xff]
        %v730 = vld [vmem:[%s559 + $0x8] sm:$0xff]
        %v731 = vld [vmem:[%s559 + $0x10] sm:$0xff]
        %v732 = vld [vmem:[%s559 + $0x18] sm:$0xff]
        %v733 = vld [vmem:[%s565] sm:$0xff]
        %v734 = vld [vmem:[%s565 + $0x8] sm:$0xff]
        %v735 = vld [vmem:[%s565 + $0x10] sm:$0xff]
        %v736 = vld [vmem:[%s565 + $0x18] sm:$0xff]
        %737 = vmatprep.subr.mxu0 0.0
        %738 = vmatpush1.msra.mxu0 %v665
        %739 = vmatprep.subr.mxu0 0.0
        %740 = vmatpush1.msra.mxu0 %v666
        %741 = vmatprep.subr.mxu0 0.0
        %742 = vmatpush1.msra.mxu0 %v667
        %743 = vmatprep.subr.mxu0 0.0
        %744 = vmatpush1.msra.mxu0 %v668
        %745 = vmatprep.subr.mxu0 0.0
        %746 = vmatpush1.msra.mxu0 %v669
        %747 = vmatprep.subr.mxu0 0.0
        %748 = vmatpush1.msra.mxu0 %v670
        %749 = vmatprep.subr.mxu0 0.0
        %750 = vmatpush1.msra.mxu0 %v671
        %751 = vmatprep.subr.mxu0 0.0
        %752 = vmatpush1.msra.mxu0 %v672
        %753 = vmatprep.subr.mxu0 0.0
        %754 = vmatpush1.msra.mxu0 %v673
        %755 = vmatprep.subr.mxu0 0.0
        %756 = vmatpush1.msra.mxu0 %v674
        %757 = vmatprep.subr.mxu0 0.0
        %758 = vmatpush1.msra.mxu0 %v675
        %759 = vmatprep.subr.mxu0 0.0
        %760 = vmatpush1.msra.mxu0 %v676
        %761 = vmatprep.subr.mxu0 0.0
        %762 = vmatpush1.msra.mxu0 %v677
        %763 = vmatprep.subr.mxu0 0.0
        %764 = vmatpush1.msra.mxu0 %v678
        %765 = vmatprep.subr.mxu0 0.0
        %766 = vmatpush1.msra.mxu0 %v679
        %767 = vmatprep.subr.mxu0 0.0
        %768 = vmatpush1.msra.mxu0 %v680
        %769 = vmatprep.subr.mxu0 0.0
        %770 = vmatpush1.msra.mxu0 0.0
        %771 = vmatprep.subr.mxu0 0.0
        %772 = vmatpush1.msra.mxu0 0.0
        %773 = vmatprep.subr.mxu0 0.0
        %774 = vmatpush1.msra.mxu0 0.0
        %775 = vmatprep.subr.mxu0 0.0
        %776 = vmatpush1.msra.mxu0 0.0
        %777 = vmatprep.subr.mxu0 0.0
        %778 = vmatpush1.msra.mxu0 0.0
        %779 = vmatprep.subr.mxu0 0.0
        %780 = vmatpush1.msra.mxu0 0.0
        %781 = vmatprep.subr.mxu0 0.0
        %782 = vmatpush1.msra.mxu0 0.0
        %783 = vmatprep.subr.mxu0 0.0
        %784 = vmatpush1.msra.mxu0 0.0
        %785 = vmatprep.subr.mxu0 0.0
        %786 = vmatpush1.msra.mxu0 0.0
        %787 = vmatprep.subr.mxu0 0.0
        %788 = vmatpush1.msra.mxu0 0.0
        %789 = vmatprep.subr.mxu0 0.0
        %790 = vmatpush1.msra.mxu0 0.0
        %791 = vmatprep.subr.mxu0 0.0
        %792 = vmatpush1.msra.mxu0 0.0
        %793 = vmatprep.subr.mxu0 0.0
        %794 = vmatpush1.msra.mxu0 0.0
        %795 = vmatprep.subr.mxu0 0.0
        %796 = vmatpush1.msra.mxu0 0.0
        %797 = vmatprep.subr.mxu0 0.0
        %798 = vmatpush1.msra.mxu0 0.0
        %799 = vmatprep.subr.mxu0 0.0
        %800 = vmatpush1.msra.mxu0 0.0
        %801 = vmatprep.mubr.f32.mxu0 0.0
        %802 = vmatmul.mubr.f32.gmra.mrb[0].mxu0 %v729
        %v803 = vpop.f32.mrb[0].mxu0
        %v804 = vadd.f32 0.0, %v803
        %v805 = vpop.f32.mrb[0].mxu0
        %806 = vmatprep.mubr.f32.mxu0 0.0
        %807 = vmatmul.mubr.f32.gmra.mrb[0].mxu0 %v730
        %v808 = vpop.f32.mrb[0].mxu0
        %v809 = vadd.f32 0.0, %v808
        %v810 = vpop.f32.mrb[0].mxu0
        %811 = vmatprep.mubr.f32.mxu0 0.0
        %812 = vmatmul.mubr.f32.gmra.mrb[0].mxu0 %v731
        %v813 = vpop.f32.mrb[0].mxu0
        %v814 = vadd.f32 0.0, %v813
        %v815 = vpop.f32.mrb[0].mxu0
        %816 = vmatprep.mubr.f32.mxu0 0.0
        %817 = vmatmul.mubr.f32.gmra.mrb[0].mxu0 %v732
        %v818 = vpop.f32.mrb[0].mxu0
        %v819 = vadd.f32 0.0, %v818
        %v820 = vpop.f32.mrb[0].mxu0
        %821 = vdwg.mxu0
        %822 = vmatprep.subr.mxu0 0.0
        %823 = vmatpush1.msra.mxu0 %v713
        %824 = vmatprep.subr.mxu0 0.0
        %825 = vmatpush1.msra.mxu0 %v714
        %826 = vmatprep.subr.mxu0 0.0
        %827 = vmatpush1.msra.mxu0 %v715
        %828 = vmatprep.subr.mxu0 0.0
        %829 = vmatpush1.msra.mxu0 %v716
        %830 = vmatprep.subr.mxu0 0.0
        %831 = vmatpush1.msra.mxu0 %v717
        %832 = vmatprep.subr.mxu0 0.0
        %833 = vmatpush1.msra.mxu0 %v718
        %834 = vmatprep.subr.mxu0 0.0
        %835 = vmatpush1.msra.mxu0 %v719
        %836 = vmatprep.subr.mxu0 0.0
        %837 = vmatpush1.msra.mxu0 %v720
        %838 = vmatprep.subr.mxu0 0.0
        %839 = vmatpush1.msra.mxu0 %v721
        %840 = vmatprep.subr.mxu0 0.0
        %841 = vmatpush1.msra.mxu0 %v722
        %842 = vmatprep.subr.mxu0 0.0
        %843 = vmatpush1.msra.mxu0 %v723
        %844 = vmatprep.subr.mxu0 0.0
        %845 = vmatpush1.msra.mxu0 %v724
        %846 = vmatprep.subr.mxu0 0.0
        %847 = vmatpush1.msra.mxu0 %v725
        %848 = vmatprep.subr.mxu0 0.0
        %849 = vmatpush1.msra.mxu0 %v726
        %850 = vmatprep.subr.mxu0 0.0
        %851 = vmatpush1.msra.mxu0 %v727
        %852 = vmatprep.subr.mxu0 0.0
        %853 = vmatpush1.msra.mxu0 %v728
        %854 = vmatprep.subr.mxu0 0.0
        %855 = vmatpush1.msra.mxu0 0.0
        %856 = vmatprep.subr.mxu0 0.0
        %857 = vmatpush1.msra.mxu0 0.0
        %858 = vmatprep.subr.mxu0 0.0
        %859 = vmatpush1.msra.mxu0 0.0
        %860 = vmatprep.subr.mxu0 0.0
        %861 = vmatpush1.msra.mxu0 0.0
        %862 = vmatprep.subr.mxu0 0.0
        %863 = vmatpush1.msra.mxu0 0.0
        %864 = vmatprep.subr.mxu0 0.0
        %865 = vmatpush1.msra.mxu0 0.0
        %866 = vmatprep.subr.mxu0 0.0
        %867 = vmatpush1.msra.mxu0 0.0
        %868 = vmatprep.subr.mxu0 0.0
        %869 = vmatpush1.msra.mxu0 0.0
        %870 = vmatprep.subr.mxu0 0.0
        %871 = vmatpush1.msra.mxu0 0.0
        %872 = vmatprep.subr.mxu0 0.0
        %873 = vmatpush1.msra.mxu0 0.0
        %874 = vmatprep.subr.mxu0 0.0
        %875 = vmatpush1.msra.mxu0 0.0
        %876 = vmatprep.subr.mxu0 0.0
        %877 = vmatpush1.msra.mxu0 0.0
        %878 = vmatprep.subr.mxu0 0.0
        %879 = vmatpush1.msra.mxu0 0.0
        %880 = vmatprep.subr.mxu0 0.0
        %881 = vmatpush1.msra.mxu0 0.0
        %882 = vmatprep.subr.mxu0 0.0
        %883 = vmatpush1.msra.mxu0 0.0
        %884 = vmatprep.subr.mxu0 0.0
        %885 = vmatpush1.msra.mxu0 0.0
        %886 = vmatprep.mubr.f32.mxu0 0.0
        %887 = vmatmul.mubr.f32.gmra.mrb[0].mxu0 %v733
        %v888 = vpop.f32.mrb[0].mxu0
        %v889 = vadd.f32 0.0, %v888
        %v890 = vpop.f32.mrb[0].mxu0
        %891 = vmatprep.mubr.f32.mxu0 0.0
        %892 = vmatmul.mubr.f32.gmra.mrb[0].mxu0 %v734
        %v893 = vpop.f32.mrb[0].mxu0
        %v894 = vadd.f32 0.0, %v893
        %v895 = vpop.f32.mrb[0].mxu0
        %896 = vmatprep.mubr.f32.mxu0 0.0
        %897 = vmatmul.mubr.f32.gmra.mrb[0].mxu0 %v735
        %v898 = vpop.f32.mrb[0].mxu0
        %v899 = vadd.f32 0.0, %v898
        %v900 = vpop.f32.mrb[0].mxu0
        %901 = vmatprep.mubr.f32.mxu0 0.0
        %902 = vmatmul.mubr.f32.gmra.mrb[0].mxu0 %v736
        %v903 = vpop.f32.mrb[0].mxu0
        %v904 = vadd.f32 0.0, %v903
        %v905 = vpop.f32.mrb[0].mxu0
        %906 = vdwg.mxu0
        %v907 = vsub.f32 %v804, %v889
        %v908 = vsub.f32 %v809, %v894
        %v909 = vsub.f32 %v814, %v899
        %v910 = vsub.f32 %v819, %v904
        %911 = vmatprep.subr.mxu0 0.0
        %912 = vmatpush1.msra.mxu0 %v665
        %913 = vmatprep.subr.mxu0 0.0
        %914 = vmatpush1.msra.mxu0 %v666
        %915 = vmatprep.subr.mxu0 0.0
        %916 = vmatpush1.msra.mxu0 %v667
        %917 = vmatprep.subr.mxu0 0.0
        %918 = vmatpush1.msra.mxu0 %v668
        %919 = vmatprep.subr.mxu0 0.0
        %920 = vmatpush1.msra.mxu0 %v669
        %921 = vmatprep.subr.mxu0 0.0
        %922 = vmatpush1.msra.mxu0 %v670
        %923 = vmatprep.subr.mxu0 0.0
        %924 = vmatpush1.msra.mxu0 %v671
        %925 = vmatprep.subr.mxu0 0.0
        %926 = vmatpush1.msra.mxu0 %v672
        %927 = vmatprep.subr.mxu0 0.0
        %928 = vmatpush1.msra.mxu0 %v673
        %929 = vmatprep.subr.mxu0 0.0
        %930 = vmatpush1.msra.mxu0 %v674
        %931 = vmatprep.subr.mxu0 0.0
        %932 = vmatpush1.msra.mxu0 %v675
        %933 = vmatprep.subr.mxu0 0.0
        %934 = vmatpush1.msra.mxu0 %v676
        %935 = vmatprep.subr.mxu0 0.0
        %936 = vmatpush1.msra.mxu0 %v677
        %937 = vmatprep.subr.mxu0 0.0
        %938 = vmatpush1.msra.mxu0 %v678
        %939 = vmatprep.subr.mxu0 0.0
        %940 = vmatpush1.msra.mxu0 %v679
        %941 = vmatprep.subr.mxu0 0.0
        %942 = vmatpush1.msra.mxu0 %v680
        %943 = vmatprep.subr.mxu0 0.0
        %944 = vmatpush1.msra.mxu0 0.0
        %945 = vmatprep.subr.mxu0 0.0
        %946 = vmatpush1.msra.mxu0 0.0
        %947 = vmatprep.subr.mxu0 0.0
        %948 = vmatpush1.msra.mxu0 0.0
        %949 = vmatprep.subr.mxu0 0.0
        %950 = vmatpush1.msra.mxu0 0.0
        %951 = vmatprep.subr.mxu0 0.0
        %952 = vmatpush1.msra.mxu0 0.0
        %953 = vmatprep.subr.mxu0 0.0
        %954 = vmatpush1.msra.mxu0 0.0
        %955 = vmatprep.subr.mxu0 0.0
        %956 = vmatpush1.msra.mxu0 0.0
        %957 = vmatprep.subr.mxu0 0.0
        %958 = vmatpush1.msra.mxu0 0.0
        %959 = vmatprep.subr.mxu0 0.0
        %960 = vmatpush1.msra.mxu0 0.0
        %961 = vmatprep.subr.mxu0 0.0
        %962 = vmatpush1.msra.mxu0 0.0
        %963 = vmatprep.subr.mxu0 0.0
        %964 = vmatpush1.msra.mxu0 0.0
        %965 = vmatprep.subr.mxu0 0.0
        %966 = vmatpush1.msra.mxu0 0.0
        %967 = vmatprep.subr.mxu0 0.0
        %968 = vmatpush1.msra.mxu0 0.0
        %969 = vmatprep.subr.mxu0 0.0
        %970 = vmatpush1.msra.mxu0 0.0
        %971 = vmatprep.subr.mxu0 0.0
        %972 = vmatpush1.msra.mxu0 0.0
        %973 = vmatprep.subr.mxu0 0.0
        %974 = vmatpush1.msra.mxu0 0.0
        %975 = vmatprep.mubr.f32.mxu0 0.0
        %976 = vmatmul.mubr.f32.gmra.mrb[0].mxu0 %v733
        %v977 = vpop.f32.mrb[0].mxu0
        %v978 = vadd.f32 0.0, %v977
        %v979 = vpop.f32.mrb[0].mxu0
        %980 = vmatprep.mubr.f32.mxu0 0.0
        %981 = vmatmul.mubr.f32.gmra.mrb[0].mxu0 %v734
        %v982 = vpop.f32.mrb[0].mxu0
        %v983 = vadd.f32 0.0, %v982
        %v984 = vpop.f32.mrb[0].mxu0
        %985 = vmatprep.mubr.f32.mxu0 0.0
        %986 = vmatmul.mubr.f32.gmra.mrb[0].mxu0 %v735
        %v987 = vpop.f32.mrb[0].mxu0
        %v988 = vadd.f32 0.0, %v987
        %v989 = vpop.f32.mrb[0].mxu0
        %990 = vmatprep.mubr.f32.mxu0 0.0
        %991 = vmatmul.mubr.f32.gmra.mrb[0].mxu0 %v736
        %v992 = vpop.f32.mrb[0].mxu0
        %v993 = vadd.f32 0.0, %v992
        %v994 = vpop.f32.mrb[0].mxu0
        %995 = vdwg.mxu0
        %996 = vmatprep.subr.mxu0 0.0
        %997 = vmatpush1.msra.mxu0 %v713
        %998 = vmatprep.subr.mxu0 0.0
        %999 = vmatpush1.msra.mxu0 %v714
        %1000 = vmatprep.subr.mxu0 0.0
        %1001 = vmatpush1.msra.mxu0 %v715
        %1002 = vmatprep.subr.mxu0 0.0
        %1003 = vmatpush1.msra.mxu0 %v716
        %1004 = vmatprep.subr.mxu0 0.0
        %1005 = vmatpush1.msra.mxu0 %v717
        %1006 = vmatprep.subr.mxu0 0.0
        %1007 = vmatpush1.msra.mxu0 %v718
        %1008 = vmatprep.subr.mxu0 0.0
        %1009 = vmatpush1.msra.mxu0 %v719
        %1010 = vmatprep.subr.mxu0 0.0
        %1011 = vmatpush1.msra.mxu0 %v720
        %1012 = vmatprep.subr.mxu0 0.0
        %1013 = vmatpush1.msra.mxu0 %v721
        %1014 = vmatprep.subr.mxu0 0.0
        %1015 = vmatpush1.msra.mxu0 %v722
        %1016 = vmatprep.subr.mxu0 0.0
        %1017 = vmatpush1.msra.mxu0 %v723
        %1018 = vmatprep.subr.mxu0 0.0
        %1019 = vmatpush1.msra.mxu0 %v724
        %1020 = vmatprep.subr.mxu0 0.0
        %1021 = vmatpush1.msra.mxu0 %v725
        %1022 = vmatprep.subr.mxu0 0.0
        %1023 = vmatpush1.msra.mxu0 %v726
        %1024 = vmatprep.subr.mxu0 0.0
        %1025 = vmatpush1.msra.mxu0 %v727
        %1026 = vmatprep.subr.mxu0 0.0
        %1027 = vmatpush1.msra.mxu0 %v728
        %1028 = vmatprep.subr.mxu0 0.0
        %1029 = vmatpush1.msra.mxu0 0.0
        %1030 = vmatprep.subr.mxu0 0.0
        %1031 = vmatpush1.msra.mxu0 0.0
        %1032 = vmatprep.subr.mxu0 0.0
        %1033 = vmatpush1.msra.mxu0 0.0
        %1034 = vmatprep.subr.mxu0 0.0
        %1035 = vmatpush1.msra.mxu0 0.0
        %1036 = vmatprep.subr.mxu0 0.0
        %1037 = vmatpush1.msra.mxu0 0.0
        %1038 = vmatprep.subr.mxu0 0.0
        %1039 = vmatpush1.msra.mxu0 0.0
        %1040 = vmatprep.subr.mxu0 0.0
        %1041 = vmatpush1.msra.mxu0 0.0
        %1042 = vmatprep.subr.mxu0 0.0
        %1043 = vmatpush1.msra.mxu0 0.0
        %1044 = vmatprep.subr.mxu0 0.0
        %1045 = vmatpush1.msra.mxu0 0.0
        %1046 = vmatprep.subr.mxu0 0.0
        %1047 = vmatpush1.msra.mxu0 0.0
        %1048 = vmatprep.subr.mxu0 0.0
        %1049 = vmatpush1.msra.mxu0 0.0
        %1050 = vmatprep.subr.mxu0 0.0
        %1051 = vmatpush1.msra.mxu0 0.0
        %1052 = vmatprep.subr.mxu0 0.0
        %1053 = vmatpush1.msra.mxu0 0.0
        %1054 = vmatprep.subr.mxu0 0.0
        %1055 = vmatpush1.msra.mxu0 0.0
        %1056 = vmatprep.subr.mxu0 0.0
        %1057 = vmatpush1.msra.mxu0 0.0
        %1058 = vmatprep.subr.mxu0 0.0
        %1059 = vmatpush1.msra.mxu0 0.0
        %1060 = vmatprep.mubr.f32.mxu0 0.0
        %1061 = vmatmul.mubr.f32.gmra.mrb[0].mxu0 %v729
        %v1062 = vpop.f32.mrb[0].mxu0
        %v1063 = vadd.f32 %v978, %v1062
        %v1064 = vpop.f32.mrb[0].mxu0
        %1065 = vmatprep.mubr.f32.mxu0 0.0
        %1066 = vmatmul.mubr.f32.gmra.mrb[0].mxu0 %v730
        %v1067 = vpop.f32.mrb[0].mxu0
        %v1068 = vadd.f32 %v983, %v1067
        %v1069 = vpop.f32.mrb[0].mxu0
        %1070 = vmatprep.mubr.f32.mxu0 0.0
        %1071 = vmatmul.mubr.f32.gmra.mrb[0].mxu0 %v731
        %v1072 = vpop.f32.mrb[0].mxu0
        %v1073 = vadd.f32 %v988, %v1072
        %v1074 = vpop.f32.mrb[0].mxu0
        %1075 = vmatprep.mubr.f32.mxu0 0.0
        %1076 = vmatmul.mubr.f32.gmra.mrb[0].mxu0 %v732
        %v1077 = vpop.f32.mrb[0].mxu0
        %v1078 = vadd.f32 %v993, %v1077
        %v1079 = vpop.f32.mrb[0].mxu0
        %1080 = vdwg.mxu0
        %v1081 = vld [vmem:[%s7] sm:$0xff]
        %v1082 = vld [vmem:[%s7 + $0x8] sm:$0xff]
        %v1083 = vld [vmem:[%s7 + $0x10] sm:$0xff]
        %v1084 = vld [vmem:[%s7 + $0x18] sm:$0xff]
        %v1085 = vld [vmem:[%s7 + $0x20] sm:$0xff]
        %v1086 = vld [vmem:[%s7 + $0x28] sm:$0xff]
        %v1087 = vld [vmem:[%s7 + $0x30] sm:$0xff]
        %v1088 = vld [vmem:[%s7 + $0x38] sm:$0xff]
        %v1089 = vld [vmem:[%s7 + $0x40] sm:$0xff]
        %v1090 = vld [vmem:[%s7 + $0x48] sm:$0xff]
        %v1091 = vld [vmem:[%s7 + $0x50] sm:$0xff]
        %v1092 = vld [vmem:[%s7 + $0x58] sm:$0xff]
        %v1093 = vld [vmem:[%s7 + $0x60] sm:$0xff]
        %v1094 = vld [vmem:[%s7 + $0x68] sm:$0xff]
        %v1095 = vld [vmem:[%s7 + $0x70] sm:$0xff]
        %v1096 = vld [vmem:[%s7 + $0x78] sm:$0xff]
        %v1097 = vld [vmem:[%s8] sm:$0xff]
        %v1098 = vld [vmem:[%s8 + $0x8] sm:$0xff]
        %v1099 = vld [vmem:[%s8 + $0x10] sm:$0xff]
        %v1100 = vld [vmem:[%s8 + $0x18] sm:$0xff]
        %v1101 = vld [vmem:[%s8 + $0x20] sm:$0xff]
        %v1102 = vld [vmem:[%s8 + $0x28] sm:$0xff]
        %v1103 = vld [vmem:[%s8 + $0x30] sm:$0xff]
        %v1104 = vld [vmem:[%s8 + $0x38] sm:$0xff]
        %v1105 = vld [vmem:[%s8 + $0x40] sm:$0xff]
        %v1106 = vld [vmem:[%s8 + $0x48] sm:$0xff]
        %v1107 = vld [vmem:[%s8 + $0x50] sm:$0xff]
        %v1108 = vld [vmem:[%s8 + $0x58] sm:$0xff]
        %v1109 = vld [vmem:[%s8 + $0x60] sm:$0xff]
        %v1110 = vld [vmem:[%s8 + $0x68] sm:$0xff]
        %v1111 = vld [vmem:[%s8 + $0x70] sm:$0xff]
        %v1112 = vld [vmem:[%s8 + $0x78] sm:$0xff]
        %1113 = vmatprep.subr.mxu0 0.0
        %1114 = vmatpush1.msra.mxu0 %v1081
        %1115 = vmatprep.subr.mxu0 0.0
        %1116 = vmatpush1.msra.mxu0 %v1082
        %1117 = vmatprep.subr.mxu0 0.0
        %1118 = vmatpush1.msra.mxu0 %v1083
        %1119 = vmatprep.subr.mxu0 0.0
        %1120 = vmatpush1.msra.mxu0 %v1084
        %1121 = vmatprep.subr.mxu0 0.0
        %1122 = vmatpush1.msra.mxu0 %v1085
        %1123 = vmatprep.subr.mxu0 0.0
        %1124 = vmatpush1.msra.mxu0 %v1086
        %1125 = vmatprep.subr.mxu0 0.0
        %1126 = vmatpush1.msra.mxu0 %v1087
        %1127 = vmatprep.subr.mxu0 0.0
        %1128 = vmatpush1.msra.mxu0 %v1088
        %1129 = vmatprep.subr.mxu0 0.0
        %1130 = vmatpush1.msra.mxu0 %v1089
        %1131 = vmatprep.subr.mxu0 0.0
        %1132 = vmatpush1.msra.mxu0 %v1090
        %1133 = vmatprep.subr.mxu0 0.0
        %1134 = vmatpush1.msra.mxu0 %v1091
        %1135 = vmatprep.subr.mxu0 0.0
        %1136 = vmatpush1.msra.mxu0 %v1092
        %1137 = vmatprep.subr.mxu0 0.0
        %1138 = vmatpush1.msra.mxu0 %v1093
        %1139 = vmatprep.subr.mxu0 0.0
        %1140 = vmatpush1.msra.mxu0 %v1094
        %1141 = vmatprep.subr.mxu0 0.0
        %1142 = vmatpush1.msra.mxu0 %v1095
        %1143 = vmatprep.subr.mxu0 0.0
        %1144 = vmatpush1.msra.mxu0 %v1096
        %1145 = vmatprep.subr.mxu0 0.0
        %1146 = vmatpush1.msra.mxu0 0.0
        %1147 = vmatprep.subr.mxu0 0.0
        %1148 = vmatpush1.msra.mxu0 0.0
        %1149 = vmatprep.subr.mxu0 0.0
        %1150 = vmatpush1.msra.mxu0 0.0
        %1151 = vmatprep.subr.mxu0 0.0
        %1152 = vmatpush1.msra.mxu0 0.0
        %1153 = vmatprep.subr.mxu0 0.0
        %1154 = vmatpush1.msra.mxu0 0.0
        %1155 = vmatprep.subr.mxu0 0.0
        %1156 = vmatpush1.msra.mxu0 0.0
        %1157 = vmatprep.subr.mxu0 0.0
        %1158 = vmatpush1.msra.mxu0 0.0
        %1159 = vmatprep.subr.mxu0 0.0
        %1160 = vmatpush1.msra.mxu0 0.0
        %1161 = vmatprep.subr.mxu0 0.0
        %1162 = vmatpush1.msra.mxu0 0.0
        %1163 = vmatprep.subr.mxu0 0.0
        %1164 = vmatpush1.msra.mxu0 0.0
        %1165 = vmatprep.subr.mxu0 0.0
        %1166 = vmatpush1.msra.mxu0 0.0
        %1167 = vmatprep.subr.mxu0 0.0
        %1168 = vmatpush1.msra.mxu0 0.0
        %1169 = vmatprep.subr.mxu0 0.0
        %1170 = vmatpush1.msra.mxu0 0.0
        %1171 = vmatprep.subr.mxu0 0.0
        %1172 = vmatpush1.msra.mxu0 0.0
        %1173 = vmatprep.subr.mxu0 0.0
        %1174 = vmatpush1.msra.mxu0 0.0
        %1175 = vmatprep.subr.mxu0 0.0
        %1176 = vmatpush1.msra.mxu0 0.0
        %1177 = vmatprep.mubr.f32.mxu0 0.0
        %1178 = vmatmul.mubr.f32.gmra.mrb[0].mxu0 %v907
        %v1179 = vpop.f32.mrb[0].mxu0
        %v1180 = vadd.f32 0.0, %v1179
        %v1181 = vpop.f32.mrb[0].mxu0
        %1182 = vmatprep.mubr.f32.mxu0 0.0
        %1183 = vmatmul.mubr.f32.gmra.mrb[0].mxu0 %v908
        %v1184 = vpop.f32.mrb[0].mxu0
        %v1185 = vadd.f32 0.0, %v1184
        %v1186 = vpop.f32.mrb[0].mxu0
        %1187 = vmatprep.mubr.f32.mxu0 0.0
        %1188 = vmatmul.mubr.f32.gmra.mrb[0].mxu0 %v909
        %v1189 = vpop.f32.mrb[0].mxu0
        %v1190 = vadd.f32 0.0, %v1189
        %v1191 = vpop.f32.mrb[0].mxu0
        %1192 = vmatprep.mubr.f32.mxu0 0.0
        %1193 = vmatmul.mubr.f32.gmra.mrb[0].mxu0 %v910
        %v1194 = vpop.f32.mrb[0].mxu0
        %v1195 = vadd.f32 0.0, %v1194
        %v1196 = vpop.f32.mrb[0].mxu0
        %1197 = vdwg.mxu0
        %1198 = vmatprep.subr.mxu0 0.0
        %1199 = vmatpush1.msra.mxu0 %v1097
        %1200 = vmatprep.subr.mxu0 0.0
        %1201 = vmatpush1.msra.mxu0 %v1098
        %1202 = vmatprep.subr.mxu0 0.0
        %1203 = vmatpush1.msra.mxu0 %v1099
        %1204 = vmatprep.subr.mxu0 0.0
        %1205 = vmatpush1.msra.mxu0 %v1100
        %1206 = vmatprep.subr.mxu0 0.0
        %1207 = vmatpush1.msra.mxu0 %v1101
        %1208 = vmatprep.subr.mxu0 0.0
        %1209 = vmatpush1.msra.mxu0 %v1102
        %1210 = vmatprep.subr.mxu0 0.0
        %1211 = vmatpush1.msra.mxu0 %v1103
        %1212 = vmatprep.subr.mxu0 0.0
        %1213 = vmatpush1.msra.mxu0 %v1104
        %1214 = vmatprep.subr.mxu0 0.0
        %1215 = vmatpush1.msra.mxu0 %v1105
        %1216 = vmatprep.subr.mxu0 0.0
        %1217 = vmatpush1.msra.mxu0 %v1106
        %1218 = vmatprep.subr.mxu0 0.0
        %1219 = vmatpush1.msra.mxu0 %v1107
        %1220 = vmatprep.subr.mxu0 0.0
        %1221 = vmatpush1.msra.mxu0 %v1108
        %1222 = vmatprep.subr.mxu0 0.0
        %1223 = vmatpush1.msra.mxu0 %v1109
        %1224 = vmatprep.subr.mxu0 0.0
        %1225 = vmatpush1.msra.mxu0 %v1110
        %1226 = vmatprep.subr.mxu0 0.0
        %1227 = vmatpush1.msra.mxu0 %v1111
        %1228 = vmatprep.subr.mxu0 0.0
        %1229 = vmatpush1.msra.mxu0 %v1112
        %1230 = vmatprep.subr.mxu0 0.0
        %1231 = vmatpush1.msra.mxu0 0.0
        %1232 = vmatprep.subr.mxu0 0.0
        %1233 = vmatpush1.msra.mxu0 0.0
        %1234 = vmatprep.subr.mxu0 0.0
        %1235 = vmatpush1.msra.mxu0 0.0
        %1236 = vmatprep.subr.mxu0 0.0
        %1237 = vmatpush1.msra.mxu0 0.0
        %1238 = vmatprep.subr.mxu0 0.0
        %1239 = vmatpush1.msra.mxu0 0.0
        %1240 = vmatprep.subr.mxu0 0.0
        %1241 = vmatpush1.msra.mxu0 0.0
        %1242 = vmatprep.subr.mxu0 0.0
        %1243 = vmatpush1.msra.mxu0 0.0
        %1244 = vmatprep.subr.mxu0 0.0
        %1245 = vmatpush1.msra.mxu0 0.0
        %1246 = vmatprep.subr.mxu0 0.0
        %1247 = vmatpush1.msra.mxu0 0.0
        %1248 = vmatprep.subr.mxu0 0.0
        %1249 = vmatpush1.msra.mxu0 0.0
        %1250 = vmatprep.subr.mxu0 0.0
        %1251 = vmatpush1.msra.mxu0 0.0
        %1252 = vmatprep.subr.mxu0 0.0
        %1253 = vmatpush1.msra.mxu0 0.0
        %1254 = vmatprep.subr.mxu0 0.0
        %1255 = vmatpush1.msra.mxu0 0.0
        %1256 = vmatprep.subr.mxu0 0.0
        %1257 = vmatpush1.msra.mxu0 0.0
        %1258 = vmatprep.subr.mxu0 0.0
        %1259 = vmatpush1.msra.mxu0 0.0
        %1260 = vmatprep.subr.mxu0 0.0
        %1261 = vmatpush1.msra.mxu0 0.0
        %1262 = vmatprep.mubr.f32.mxu0 0.0
        %1263 = vmatmul.mubr.f32.gmra.mrb[0].mxu0 %v1063
        %v1264 = vpop.f32.mrb[0].mxu0
        %v1265 = vadd.f32 0.0, %v1264
        %v1266 = vpop.f32.mrb[0].mxu0
        %1267 = vmatprep.mubr.f32.mxu0 0.0
        %1268 = vmatmul.mubr.f32.gmra.mrb[0].mxu0 %v1068
        %v1269 = vpop.f32.mrb[0].mxu0
        %v1270 = vadd.f32 0.0, %v1269
        %v1271 = vpop.f32.mrb[0].mxu0
        %1272 = vmatprep.mubr.f32.mxu0 0.0
        %1273 = vmatmul.mubr.f32.gmra.mrb[0].mxu0 %v1073
        %v1274 = vpop.f32.mrb[0].mxu0
        %v1275 = vadd.f32 0.0, %v1274
        %v1276 = vpop.f32.mrb[0].mxu0
        %1277 = vmatprep.mubr.f32.mxu0 0.0
        %1278 = vmatmul.mubr.f32.gmra.mrb[0].mxu0 %v1078
        %v1279 = vpop.f32.mrb[0].mxu0
        %v1280 = vadd.f32 0.0, %v1279
        %v1281 = vpop.f32.mrb[0].mxu0
        %1282 = vdwg.mxu0
        %v1283 = vsub.f32 %v1180, %v1265
        %v1284 = vsub.f32 %v1185, %v1270
        %v1285 = vsub.f32 %v1190, %v1275
        %v1286 = vsub.f32 %v1195, %v1280
        %1287 = vmatprep.subr.mxu0 0.0
        %1288 = vmatpush1.msra.mxu0 %v1081
        %1289 = vmatprep.subr.mxu0 0.0
        %1290 = vmatpush1.msra.mxu0 %v1082
        %1291 = vmatprep.subr.mxu0 0.0
        %1292 = vmatpush1.msra.mxu0 %v1083
        %1293 = vmatprep.subr.mxu0 0.0
        %1294 = vmatpush1.msra.mxu0 %v1084
        %1295 = vmatprep.subr.mxu0 0.0
        %1296 = vmatpush1.msra.mxu0 %v1085
        %1297 = vmatprep.subr.mxu0 0.0
        %1298 = vmatpush1.msra.mxu0 %v1086
        %1299 = vmatprep.subr.mxu0 0.0
        %1300 = vmatpush1.msra.mxu0 %v1087
        %1301 = vmatprep.subr.mxu0 0.0
        %1302 = vmatpush1.msra.mxu0 %v1088
        %1303 = vmatprep.subr.mxu0 0.0
        %1304 = vmatpush1.msra.mxu0 %v1089
        %1305 = vmatprep.subr.mxu0 0.0
        %1306 = vmatpush1.msra.mxu0 %v1090
        %1307 = vmatprep.subr.mxu0 0.0
        %1308 = vmatpush1.msra.mxu0 %v1091
        %1309 = vmatprep.subr.mxu0 0.0
        %1310 = vmatpush1.msra.mxu0 %v1092
        %1311 = vmatprep.subr.mxu0 0.0
        %1312 = vmatpush1.msra.mxu0 %v1093
        %1313 = vmatprep.subr.mxu0 0.0
        %1314 = vmatpush1.msra.mxu0 %v1094
        %1315 = vmatprep.subr.mxu0 0.0
        %1316 = vmatpush1.msra.mxu0 %v1095
        %1317 = vmatprep.subr.mxu0 0.0
        %1318 = vmatpush1.msra.mxu0 %v1096
        %1319 = vmatprep.subr.mxu0 0.0
        %1320 = vmatpush1.msra.mxu0 0.0
        %1321 = vmatprep.subr.mxu0 0.0
        %1322 = vmatpush1.msra.mxu0 0.0
        %1323 = vmatprep.subr.mxu0 0.0
        %1324 = vmatpush1.msra.mxu0 0.0
        %1325 = vmatprep.subr.mxu0 0.0
        %1326 = vmatpush1.msra.mxu0 0.0
        %1327 = vmatprep.subr.mxu0 0.0
        %1328 = vmatpush1.msra.mxu0 0.0
        %1329 = vmatprep.subr.mxu0 0.0
        %1330 = vmatpush1.msra.mxu0 0.0
        %1331 = vmatprep.subr.mxu0 0.0
        %1332 = vmatpush1.msra.mxu0 0.0
        %1333 = vmatprep.subr.mxu0 0.0
        %1334 = vmatpush1.msra.mxu0 0.0
        %1335 = vmatprep.subr.mxu0 0.0
        %1336 = vmatpush1.msra.mxu0 0.0
        %1337 = vmatprep.subr.mxu0 0.0
        %1338 = vmatpush1.msra.mxu0 0.0
        %1339 = vmatprep.subr.mxu0 0.0
        %1340 = vmatpush1.msra.mxu0 0.0
        %1341 = vmatprep.subr.mxu0 0.0
        %1342 = vmatpush1.msra.mxu0 0.0
        %1343 = vmatprep.subr.mxu0 0.0
        %1344 = vmatpush1.msra.mxu0 0.0
        %1345 = vmatprep.subr.mxu0 0.0
        %1346 = vmatpush1.msra.mxu0 0.0
        %1347 = vmatprep.subr.mxu0 0.0
        %1348 = vmatpush1.msra.mxu0 0.0
        %1349 = vmatprep.subr.mxu0 0.0
        %1350 = vmatpush1.msra.mxu0 0.0
        %1351 = vmatprep.mubr.f32.mxu0 0.0
        %1352 = vmatmul.mubr.f32.gmra.mrb[0].mxu0 %v1063
        %v1353 = vpop.f32.mrb[0].mxu0
        %v1354 = vadd.f32 0.0, %v1353
        %v1355 = vpop.f32.mrb[0].mxu0
        %1356 = vmatprep.mubr.f32.mxu0 0.0
        %1357 = vmatmul.mubr.f32.gmra.mrb[0].mxu0 %v1068
        %v1358 = vpop.f32.mrb[0].mxu0
        %v1359 = vadd.f32 0.0, %v1358
        %v1360 = vpop.f32.mrb[0].mxu0
        %1361 = vmatprep.mubr.f32.mxu0 0.0
        %1362 = vmatmul.mubr.f32.gmra.mrb[0].mxu0 %v1073
        %v1363 = vpop.f32.mrb[0].mxu0
        %v1364 = vadd.f32 0.0, %v1363
        %v1365 = vpop.f32.mrb[0].mxu0
        %1366 = vmatprep.mubr.f32.mxu0 0.0
        %1367 = vmatmul.mubr.f32.gmra.mrb[0].mxu0 %v1078
        %v1368 = vpop.f32.mrb[0].mxu0
        %v1369 = vadd.f32 0.0, %v1368
        %v1370 = vpop.f32.mrb[0].mxu0
        %1371 = vdwg.mxu0
        %1372 = vmatprep.subr.mxu0 0.0
        %1373 = vmatpush1.msra.mxu0 %v1097
        %1374 = vmatprep.subr.mxu0 0.0
        %1375 = vmatpush1.msra.mxu0 %v1098
        %1376 = vmatprep.subr.mxu0 0.0
        %1377 = vmatpush1.msra.mxu0 %v1099
        %1378 = vmatprep.subr.mxu0 0.0
        %1379 = vmatpush1.msra.mxu0 %v1100
        %1380 = vmatprep.subr.mxu0 0.0
        %1381 = vmatpush1.msra.mxu0 %v1101
        %1382 = vmatprep.subr.mxu0 0.0
        %1383 = vmatpush1.msra.mxu0 %v1102
        %1384 = vmatprep.subr.mxu0 0.0
        %1385 = vmatpush1.msra.mxu0 %v1103
        %1386 = vmatprep.subr.mxu0 0.0
        %1387 = vmatpush1.msra.mxu0 %v1104
        %1388 = vmatprep.subr.mxu0 0.0
        %1389 = vmatpush1.msra.mxu0 %v1105
        %1390 = vmatprep.subr.mxu0 0.0
        %1391 = vmatpush1.msra.mxu0 %v1106
        %1392 = vmatprep.subr.mxu0 0.0
        %1393 = vmatpush1.msra.mxu0 %v1107
        %1394 = vmatprep.subr.mxu0 0.0
        %1395 = vmatpush1.msra.mxu0 %v1108
        %1396 = vmatprep.subr.mxu0 0.0
        %1397 = vmatpush1.msra.mxu0 %v1109
        %1398 = vmatprep.subr.mxu0 0.0
        %1399 = vmatpush1.msra.mxu0 %v1110
        %1400 = vmatprep.subr.mxu0 0.0
        %1401 = vmatpush1.msra.mxu0 %v1111
        %1402 = vmatprep.subr.mxu0 0.0
        %1403 = vmatpush1.msra.mxu0 %v1112
        %1404 = vmatprep.subr.mxu0 0.0
        %1405 = vmatpush1.msra.mxu0 0.0
        %1406 = vmatprep.subr.mxu0 0.0
        %1407 = vmatpush1.msra.mxu0 0.0
        %1408 = vmatprep.subr.mxu0 0.0
        %1409 = vmatpush1.msra.mxu0 0.0
        %1410 = vmatprep.subr.mxu0 0.0
        %1411 = vmatpush1.msra.mxu0 0.0
        %1412 = vmatprep.subr.mxu0 0.0
        %1413 = vmatpush1.msra.mxu0 0.0
        %1414 = vmatprep.subr.mxu0 0.0
        %1415 = vmatpush1.msra.mxu0 0.0
        %1416 = vmatprep.subr.mxu0 0.0
        %1417 = vmatpush1.msra.mxu0 0.0
        %1418 = vmatprep.subr.mxu0 0.0
        %1419 = vmatpush1.msra.mxu0 0.0
        %1420 = vmatprep.subr.mxu0 0.0
        %1421 = vmatpush1.msra.mxu0 0.0
        %1422 = vmatprep.subr.mxu0 0.0
        %1423 = vmatpush1.msra.mxu0 0.0
        %1424 = vmatprep.subr.mxu0 0.0
        %1425 = vmatpush1.msra.mxu0 0.0
        %1426 = vmatprep.subr.mxu0 0.0
        %1427 = vmatpush1.msra.mxu0 0.0
        %1428 = vmatprep.subr.mxu0 0.0
        %1429 = vmatpush1.msra.mxu0 0.0
        %1430 = vmatprep.subr.mxu0 0.0
        %1431 = vmatpush1.msra.mxu0 0.0
        %1432 = vmatprep.subr.mxu0 0.0
        %1433 = vmatpush1.msra.mxu0 0.0
        %1434 = vmatprep.subr.mxu0 0.0
        %1435 = vmatpush1.msra.mxu0 0.0
        %1436 = vmatprep.mubr.f32.mxu0 0.0
        %1437 = vmatmul.mubr.f32.gmra.mrb[0].mxu0 %v907
        %v1438 = vpop.f32.mrb[0].mxu0
        %v1439 = vadd.f32 %v1354, %v1438
        %v1440 = vpop.f32.mrb[0].mxu0
        %1441 = vmatprep.mubr.f32.mxu0 0.0
        %1442 = vmatmul.mubr.f32.gmra.mrb[0].mxu0 %v908
        %v1443 = vpop.f32.mrb[0].mxu0
        %v1444 = vadd.f32 %v1359, %v1443
        %v1445 = vpop.f32.mrb[0].mxu0
        %1446 = vmatprep.mubr.f32.mxu0 0.0
        %1447 = vmatmul.mubr.f32.gmra.mrb[0].mxu0 %v909
        %v1448 = vpop.f32.mrb[0].mxu0
        %v1449 = vadd.f32 %v1364, %v1448
        %v1450 = vpop.f32.mrb[0].mxu0
        %1451 = vmatprep.mubr.f32.mxu0 0.0
        %1452 = vmatmul.mubr.f32.gmra.mrb[0].mxu0 %v910
        %v1453 = vpop.f32.mrb[0].mxu0
        %v1454 = vadd.f32 %v1369, %v1453
        %v1455 = vpop.f32.mrb[0].mxu0
        %1456 = vdwg.mxu0
        %s1457 = sld [smem:[#allocation2 + %s42]]
        %v1458 = vmul.f32 %v1283, %v1283
        %v1459 = vmul.f32 %v1284, %v1284
        %v1460 = vmul.f32 %v1285, %v1285
        %v1461 = vmul.f32 %v1286, %v1286
        %v1462 = vmul.f32 %v1439, %v1439
        %v1463 = vmul.f32 %v1444, %v1444
        %v1464 = vmul.f32 %v1449, %v1449
        %v1465 = vmul.f32 %v1454, %v1454
        %v1466 = vadd.f32 %v1458, %v1462
        %v1467 = vadd.f32 %v1459, %v1463
        %v1468 = vadd.f32 %v1460, %v1464
        %v1469 = vadd.f32 %v1461, %v1465
        %v1470 = vstv %s1457
        %v1471 = vmul.f32 %v1470, %v1466
        %v1472 = vmul.f32 %v1470, %v1467
        %v1473 = vmul.f32 %v1470, %v1468
        %v1474 = vmul.f32 %v1470, %v1469
        %p1475 = scmp.eq.s32.totalorder %s42, 0
        // Predicated region
        $region73: #{tpu_custom_call.1} parent=55 // pred_check
          %p1476 = pneg %p1475
        $region74: #{tpu_custom_call.1} parent=55 // pred_check_branch
          %1478 = sbr.rel (%p1476) target = $region76
        $region75: #{tpu_custom_call.1} parent=55 // pred_region
          %vm1479 = vcmask 261120
          %1480 = vst.msk [vmem:[%s542] sm:$0xff] %vm1479, %v1471
          %1481 = vst.msk [vmem:[%s542 + $0x8] sm:$0xff] %vm1479, %v1472
          %1482 = vst.msk [vmem:[%s542 + $0x10] sm:$0xff] %vm1479, %v1473
          %1483 = vst.msk [vmem:[%s542 + $0x18] sm:$0xff] %vm1479, %v1474
        $region76: #{tpu_custom_call.1} parent=55 // pred_fallthru
          _
        %p1484 = scmp.gt.s32.totalorder %s42, 0
        // Predicated region
        $region77: #{tpu_custom_call.1} parent=55 // pred_check
          %p1485 = pneg %p1484
        $region78: #{tpu_custom_call.1} parent=55 // pred_check_branch
          %1487 = sbr.rel (%p1485) target = $region80
        $region79: #{tpu_custom_call.1} parent=55 // pred_region
          %v1488 = vld [vmem:[%s542] sm:$0xff]
          %v1489 = vld [vmem:[%s542 + $0x8] sm:$0xff]
          %v1490 = vld [vmem:[%s542 + $0x10] sm:$0xff]
          %v1491 = vld [vmem:[%s542 + $0x18] sm:$0xff]
          %v1492 = vadd.f32 %v1488, %v1471
          %v1493 = vadd.f32 %v1489, %v1472
          %v1494 = vadd.f32 %v1490, %v1473
          %v1495 = vadd.f32 %v1491, %v1474
          %vm1496 = vcmask 261120
          %1497 = vst.msk [vmem:[%s542] sm:$0xff] %vm1496, %v1492
          %1498 = vst.msk [vmem:[%s542 + $0x8] sm:$0xff] %vm1496, %v1493
          %1499 = vst.msk [vmem:[%s542 + $0x10] sm:$0xff] %vm1496, %v1494
          %1500 = vst.msk [vmem:[%s542 + $0x18] sm:$0xff] %vm1496, %v1495
        $region80: #{tpu_custom_call.1} parent=55 // pred_fallthru
          _
        %p1501 = scmp.eq.s32.totalorder %s42, 7
        // Predicated region
        $region81: #{tpu_custom_call.1} parent=55 // pred_check
          %p1502 = pneg %p1501
        $region82: #{tpu_custom_call.1} parent=55 // pred_check_branch
          %1504 = sbr.rel (%p1502) target = $region84
        $region83: #{tpu_custom_call.1} parent=55 // pred_region
          %v1505 = vld [vmem:[%s542] sm:$0xff]
          %v1506 = vld [vmem:[%s542 + $0x8] sm:$0xff]
          %v1507 = vld [vmem:[%s542 + $0x10] sm:$0xff]
          %v1508 = vld [vmem:[%s542 + $0x18] sm:$0xff]
          %v1509 = vsub.f32 %v1505, 0.225
          %v1510 = vsub.f32 %v1506, 0.225
          %v1511 = vsub.f32 %v1507, 0.225
          %v1512 = vsub.f32 %v1508, 0.225
          %v1513 = vmul.f32 %v1509, 50.0
          %v1514 = vmul.f32 %v1510, 50.0
          %v1515 = vmul.f32 %v1511, 50.0
          %v1516 = vmul.f32 %v1512, 50.0
          %v1517 = vxor.u32 %v1513, 2147483648
          %v1518 = vxor.u32 %v1514, 2147483648
          %v1519 = vxor.u32 %v1515, 2147483648
          %v1520 = vxor.u32 %v1516, 2147483648
          %v1521 = vmul.f32 %v1517, 1.442695
          %v1522 = vpow.pop %v1521
          %v1523 = vmul.f32 %v1518, 1.442695
          %v1524 = vpow.pop %v1523
          %v1525 = vmul.f32 %v1519, 1.442695
          %v1526 = vpow.pop %v1525
          %v1527 = vmul.f32 %v1520, 1.442695
          %v1528 = vpow.pop %v1527
          %v1529 = vadd.f32 %v1522, 1.0
          %v1530 = vadd.f32 %v1524, 1.0
          %v1531 = vadd.f32 %v1526, 1.0
          %v1532 = vadd.f32 %v1528, 1.0
          %v1533 = vrcp.pop %v1529
          %v1534 = vmul.f32 1.0, %v1533
          %v1535 = vrcp.pop %v1530
          %v1536 = vmul.f32 1.0, %v1535
          %v1537 = vrcp.pop %v1531
          %v1538 = vmul.f32 1.0, %v1537
          %v1539 = vrcp.pop %v1532
          %v1540 = vmul.f32 1.0, %v1539
          %vm1541 = vcmask 261120
          %1542 = vst.msk [vmem:[%s542] sm:$0xff] %vm1541, %v1534
          %1543 = vst.msk [vmem:[%s542 + $0x8] sm:$0xff] %vm1541, %v1536
          %1544 = vst.msk [vmem:[%s542 + $0x10] sm:$0xff] %vm1541, %v1538
          %1545 = vst.msk [vmem:[%s542 + $0x18] sm:$0xff] %vm1541, %v1540
          %v1546 = vmul.f32 %v1505, 1.0404
          %v1547 = vmul.f32 %v1506, 1.0404
          %v1548 = vmul.f32 %v1507, 1.0404
          %v1549 = vmul.f32 %v1508, 1.0404
          %v1550 = vsub.f32 %v1546, 0.225
          %v1551 = vsub.f32 %v1547, 0.225
          %v1552 = vsub.f32 %v1548, 0.225
          %v1553 = vsub.f32 %v1549, 0.225
          %v1554 = vmul.f32 %v1550, 50.0
          %v1555 = vmul.f32 %v1551, 50.0
          %v1556 = vmul.f32 %v1552, 50.0
          %v1557 = vmul.f32 %v1553, 50.0
          %v1558 = vxor.u32 %v1554, 2147483648
          %v1559 = vxor.u32 %v1555, 2147483648
          %v1560 = vxor.u32 %v1556, 2147483648
          %v1561 = vxor.u32 %v1557, 2147483648
          %v1562 = vmul.f32 %v1558, 1.442695
          %v1563 = vpow.pop %v1562
          %v1564 = vmul.f32 %v1559, 1.442695
          %v1565 = vpow.pop %v1564
          %v1566 = vmul.f32 %v1560, 1.442695
          %v1567 = vpow.pop %v1566
          %v1568 = vmul.f32 %v1561, 1.442695
          %v1569 = vpow.pop %v1568
          %v1570 = vadd.f32 %v1563, 1.0
          %v1571 = vadd.f32 %v1565, 1.0
          %v1572 = vadd.f32 %v1567, 1.0
          %v1573 = vadd.f32 %v1569, 1.0
          %v1574 = vrcp.pop %v1570
          %v1575 = vmul.f32 1.0, %v1574
          %v1576 = vrcp.pop %v1571
          %v1577 = vmul.f32 1.0, %v1576
          %v1578 = vrcp.pop %v1572
          %v1579 = vmul.f32 1.0, %v1578
          %v1580 = vrcp.pop %v1573
          %v1581 = vmul.f32 1.0, %v1580
          %1582 = vst.msk [vmem:[%s549] sm:$0xff] %vm1541, %v1575
          %1583 = vst.msk [vmem:[%s549 + $0x8] sm:$0xff] %vm1541, %v1577
          %1584 = vst.msk [vmem:[%s549 + $0x10] sm:$0xff] %vm1541, %v1579
          %1585 = vst.msk [vmem:[%s549 + $0x18] sm:$0xff] %vm1541, %v1581
        $region84: #{tpu_custom_call.1} parent=55 // pred_fallthru
          _
        %s1586 = sand.u32 %s283, 1
        %s1587 = scalar_lea.sflag [#allocation4], %s1586
        %s1588 = sand.u32 %s283, 1
        %s1589 = smul.addr %s1588, 32
        %s1590 = scalar_lea.vmem [#allocation10], %s1589
        %s1591 = sand.u32 %s311, 1
        %s1592 = scalar_lea.sflag [#allocation12], %s1591
        %s1593 = sand.u32 %s311, 1
        %s1594 = smul.addr %s1593, 32
        %s1595 = scalar_lea.vmem [#allocation11], %s1594
        // Predicated region
        $region85: #{tpu_custom_call.1} parent=55 // pred_check
          %p1596 = pneg %p293
        $region86: #{tpu_custom_call.1} parent=55 // pred_check_branch
          %1598 = sbr.rel (%p1596) target = $region88
        $region87: #{tpu_custom_call.1} parent=55 // pred_region
          %s1599 = smul.u32 4, %s41
          %s1601 = ssub.s32 512, 512
          %1602 = vsyncadd %s1587, %s1601
          %s1603 = smul.addr %s40, 4
          %s1604 = sadd.s32 %s1599, %s1603
          %s1605 = smul.addr %s1604, 128
          %s1606 = scalar_lea.hbm %s9, %s1605
          %s1607 = sshll.u32 %s1590, 4
          %s1608 = int_to_ptr.vmem [resolvable:$true] %s1607
          %1613 = dma.vmem_to_hbm [thread:$0]  %s1608, 512, %s1606, %s1587, 128, 128, 8
        $region88: #{tpu_custom_call.1} parent=55 // pred_fallthru
          _
        // Predicated region
        $region89: #{tpu_custom_call.1} parent=55 // pred_check
          %p1614 = pneg %p321
        $region90: #{tpu_custom_call.1} parent=55 // pred_check_branch
          %1616 = sbr.rel (%p1614) target = $region92
        $region91: #{tpu_custom_call.1} parent=55 // pred_region
          %s1617 = smul.u32 4, %s41
          %s1619 = ssub.s32 512, 512
          %1620 = vsyncadd %s1592, %s1619
          %s1621 = smul.addr %s40, 4
          %s1622 = sadd.s32 %s1617, %s1621
          %s1623 = smul.addr %s1622, 128
          %s1624 = scalar_lea.hbm %s10, %s1623
          %s1625 = sshll.u32 %s1595, 4
          %s1626 = int_to_ptr.vmem [resolvable:$true] %s1625
          %1631 = dma.vmem_to_hbm [thread:$0]  %s1626, 512, %s1624, %s1592, 128, 128, 8
        $region92: #{tpu_custom_call.1} parent=55 // pred_fallthru
          _
      $region56: #{tpu_custom_call.1} parent=5 // pred_fallthru
        _
      %p1632 = scmp.le.s32.totalorder 2, %s30
      // Predicated region
      $region93: #{tpu_custom_call.1} parent=5 // pred_check
        %p1633 = pneg %p1632
      $region94: #{tpu_custom_call.1} parent=5 // pred_check_branch
        %1635 = sbr.rel (%p1633) target = $region96
      $region95: #{tpu_custom_call.1} parent=5 // pred_region
        %s1636 = ssub.s32 %s30, 2
        // Predicated region
        $region97: #{tpu_custom_call.1} parent=95 // pred_check
          %p1637 = pneg %p299
        $region98: #{tpu_custom_call.1} parent=95 // pred_check_branch
          %1639 = sbr.rel (%p1637) target = $region100
        $region99: #{tpu_custom_call.1} parent=95 // pred_region
          %s1640 = sand.u32 %s284, 1
          %s1641 = scalar_lea.sflag [#allocation4], %s1640
          %s1642 = sand.u32 %s284, 1
          %s1643 = smul.addr %s1642, 32
          %s1644 = scalar_lea.vmem [#allocation10], %s1643
          %1645 = dma.done %s1641, 512
        $region100: #{tpu_custom_call.1} parent=95 // pred_fallthru
          _
        // Predicated region
        $region101: #{tpu_custom_call.1} parent=95 // pred_check
          %p1646 = pneg %p327
        $region102: #{tpu_custom_call.1} parent=95 // pred_check_branch
          %1648 = sbr.rel (%p1646) target = $region104
        $region103: #{tpu_custom_call.1} parent=95 // pred_region
          %s1649 = sand.u32 %s312, 1
          %s1650 = scalar_lea.sflag [#allocation12], %s1649
          %s1651 = sand.u32 %s312, 1
          %s1652 = smul.addr %s1651, 32
          %s1653 = scalar_lea.vmem [#allocation11], %s1652
          %1654 = dma.done %s1650, 512
        $region104: #{tpu_custom_call.1} parent=95 // pred_fallthru
          _
      $region96: #{tpu_custom_call.1} parent=5 // pred_fallthru
        _
    $region6: #{tpu_custom_call.1} parent=1 // loop_footer
      %s34 = sadd.s32 1, %s30
    $region7: #{tpu_custom_call.1} parent=1 // loop_footer_branch
      %29 = sbr.rel target = $region3
    $region8: #{tpu_custom_call.1} parent=1 // loop_exit
      _
    %1655 = vsyncpa [#allocation3], 1
    %s1656 = scalar_lea.sflag [#allocation3], 1
    %1657 = vsyncpa %s1656, 1
    %1658 = vsyncpa [#allocation8], 1
    %s1659 = scalar_lea.sflag [#allocation8], 1
    %1660 = vsyncpa %s1659, 1
    %1661 = vsyncpa [#allocation4], 1
    %s1662 = scalar_lea.sflag [#allocation4], 1
    %1663 = vsyncpa %s1662, 1
    %1664 = vsyncpa [#allocation12], 1
    %s1665 = scalar_lea.sflag [#allocation12], 1
    %1666 = vsyncpa %s1665, 1
    %1667 = vsyncpa [#allocation5], 1
    %s1668 = scalar_lea.sflag [#allocation5], 1
    %1669 = vsyncpa %s1668, 1

</llo_original>
